<compile_context>
chip_gen: v7x
topology: tpu7x:2x2x1
jax: 0.10.0
libtpu: 0.0.40
codegen_flags: <defaults>
</compile_context>

<pallas_src>
import functools

import jax
import jax.numpy as jnp
from jax import lax
from jax.experimental import pallas as pl
from jax.experimental.pallas import tpu as pltpu

EPS = 1e-5  # nn.InstanceNorm3d default eps
_LANE = 128


def _vmem_capacity_bytes():
    try:
        return int(pltpu.get_tpu_info().vmem_capacity_bytes)
    except Exception:
        return 64 << 20  # conservative: v7x per-core VMEM


def _is_v7x():
    try:
        return "v7" in jax.devices()[0].device_kind.lower()
    except Exception:
        return False


def _se_norm_conv_kernel(x_ref, wc_ref, bc_ref,
                         wg1_ref, bg1_ref, wg2_ref, bg2_ref,
                         wb1_ref, bb1_ref, wb2_ref, bb2_ref,
                         out_ref,
                         sum_scr, sq_scr, scale_scr, shift_scr,
                         *, total_s, eps, tile_cols, x_cached, needs_mask,
                         mxu_stats):
    # x_ref:   [Cin, S_pad] (cached) or [Cin, TS] (streamed); batch squeezed.
    # wc_ref:  [Cout, Cin] (== PyTorch conv weight matrix), bc_ref: [Cout, 1]
    # wg1/wb1: [Cout, Cr], bg1/bb1: [1, Cr]; wg2/wb2: [Cout, Cr], bg2/bb2: [Cout, 1]
    # out_ref: [Cout, TS]
    phase = pl.program_id(1)
    s_idx = pl.program_id(2)
    last_s = pl.num_programs(2) - 1

    def conv_relu():
        if x_cached:
            start = pl.multiple_of(s_idx * tile_cols, tile_cols)
            x_tile = x_ref[:, pl.ds(start, tile_cols)]
        else:
            x_tile = x_ref[...]
        y = jnp.dot(wc_ref[...], x_tile, preferred_element_type=jnp.float32)
        return jnp.maximum(y + bc_ref[...], 0.0)          # [Cout, TS] f32

    # ---- phase 0: accumulate per-(batch, channel) spatial statistics ----
    @pl.when(jnp.logical_and(phase == 0, s_idx == 0))
    def _():
        sum_scr[...] = jnp.zeros_like(sum_scr)
        sq_scr[...] = jnp.zeros_like(sq_scr)

    @pl.when(phase == 0)
    def _():
        y = conv_relu()
        if needs_mask:
            col = s_idx * tile_cols + lax.broadcasted_iota(jnp.int32, y.shape, 1)
            y = jnp.where(col < total_s, y, 0.0)
        sum_scr[...] += jnp.sum(y, axis=1, keepdims=True)       # XLU reduce
        if mxu_stats:
            # v7x: move the y*y multiply to the (idle) MXU: diag(y @ y^T).
            yy = lax.dot_general(y, y, (((1,), (1,)), ((), ())),
                                 preferred_element_type=jnp.float32)
            eye = (lax.broadcasted_iota(jnp.int32, yy.shape, 0)
                   == lax.broadcasted_iota(jnp.int32, yy.shape, 1)
                   ).astype(jnp.float32)
            sq_scr[...] += jnp.sum(yy * eye, axis=1, keepdims=True)
        else:
            sq_scr[...] += jnp.sum(y * y, axis=1, keepdims=True)

    # ---- end of phase 0: fold InstanceNorm + SE gate into scale/shift ----
    @pl.when(jnp.logical_and(phase == 0, s_idx == last_s))
    def _():
        inv_n = jnp.float32(1.0 / total_s)
        mu = sum_scr[...] * inv_n                               # [Cout, 1]
        var = jnp.maximum(sq_scr[...] * inv_n - mu * mu, 0.0)   # clamp cancellation
        # TODO(synk): chunk-merged Welford would be more robust than clamped
        #             E[y^2]-mu^2 for extremely large S.

        # SE branches: tiny dots as VPU broadcast-mul + XLU reduce (no MXU
        # push/pop latency for M=1/N=1 matmuls).
        hg = jnp.maximum(jnp.sum(wg1_ref[...] * mu, axis=0, keepdims=True)
                         + bg1_ref[...], 0.0)                   # [1, Cr]
        gamma = jax.nn.sigmoid(jnp.sum(wg2_ref[...] * hg, axis=1, keepdims=True)
                               + bg2_ref[...])                  # [Cout, 1]
        hb = jnp.maximum(jnp.sum(wb1_ref[...] * mu, axis=0, keepdims=True)
                         + bb1_ref[...], 0.0)                   # [1, Cr]
        beta = jnp.tanh(jnp.sum(wb2_ref[...] * hb, axis=1, keepdims=True)
                        + bb2_ref[...])                         # [Cout, 1]

        inv_std = lax.rsqrt(var + eps)
        scale_scr[...] = gamma * inv_std
        shift_scr[...] = beta - gamma * mu * inv_std

    # ---- phase 1: recompute cheap 1x1x1 conv, apply folded scale/shift ----
    @pl.when(phase == 1)
    def _():
        y = conv_relu()
        out_ref[...] = (y * scale_scr[...] + shift_scr[...]).astype(out_ref.dtype)


def _plan_tiling(S, Cin, Cout, itemsize, vmem_cap, tile_cols=None, cache_x=None):
    """Pick (tile_cols, padded S, cache-x?) under a generation-aware VMEM budget."""
    budget = max(int(vmem_cap * 0.6), 8 << 20)
    s_up = -(-S // _LANE) * _LANE

    def workset(ts, cached):
        w = 2 * Cout * ts * itemsize              # double-buffered output tile
        w += 2 * Cout * ts * 4                    # f32 intermediates (y, FMA temps)
        if cached:
            w += 2 * Cin * s_up * itemsize        # whole-batch resident x (2 bufs)
        else:
            w += 2 * Cin * ts * itemsize          # double-buffered x tile
        return w + (64 << 10)                     # scratch + slack

    if cache_x is None:
        cache_x = workset(_LANE, True) <= budget
    if tile_cols is None:
        ts = _LANE
        for cand in range(_LANE, min(s_up, 32768) + 1, _LANE):
            if workset(cand, cache_x) <= budget:
                ts = cand
    else:
        ts = int(tile_cols)
        assert ts % _LANE == 0, "tile_cols must be a multiple of 128"
    s_pad = -(-S // ts) * ts
    return ts, s_pad, cache_x, workset(ts, cache_x)


def fast_smooth_se_norm_conv3d(x_ncdhw, params, *, tile_cols=None,
                               io_dtype=None, cache_x=None, mxu_stats=None):
    """x_ncdhw: [B, Cin, D, H, W] -> [B, Cout, D, H, W] (dtype follows io dtype)."""
    (wc, bc, wg1, bg1, wg2, bg2, wb1, bb1, wb2, bb2) = params
    B, Cin, D, H, W = x_ncdhw.shape
    Cout = wc.shape[0]
    S = D * H * W

    io_dt = jnp.dtype(io_dtype) if io_dtype is not None else jnp.dtype(x_ncdhw.dtype)
    itemsize = io_dt.itemsize
    vmem_cap = _vmem_capacity_bytes()
    ts, s_pad, use_cache, workset = _plan_tiling(
        S, Cin, Cout, itemsize, vmem_cap, tile_cols, cache_x)
    n_s = s_pad // ts
    if mxu_stats is None:
        mxu_stats = _is_v7x()

    # Free reshape only — no transpose, no extra HBM pass.
    x = x_ncdhw.reshape(B, Cin, S)
    if x.dtype != io_dt:
        x = x.astype(io_dt)
    if s_pad != S:
        x = jnp.pad(x, ((0, 0), (0, 0), (0, s_pad - S)))
    wc_k = wc if wc.dtype == io_dt else wc.astype(io_dt)   # MXU-native dot dtype

    if use_cache:
        # Block index independent of phase/s: x is DMA'd once per batch and
        # stays resident in VMEM for both phases (1 HBM read instead of 2).
        x_spec = pl.BlockSpec((None, Cin, s_pad), lambda b, p, s: (b, 0, 0))
    else:
        x_spec = pl.BlockSpec((None, Cin, ts), lambda b, p, s: (b, 0, s))

    def wspec(a):
        return pl.BlockSpec(a.shape, lambda b, p, s, _nd=a.ndim: (0,) * _nd)

    kernel = functools.partial(
        _se_norm_conv_kernel, total_s=S, eps=EPS, tile_cols=ts,
        x_cached=use_cache, needs_mask=(s_pad != S), mxu_stats=mxu_stats)

    x_hbm_reads = 1 if use_cache else 2
    weight_bytes = sum(int(a.size) * 4 for a in params)
    cost = pl.CostEstimate(
        flops=int(4 * B * S * Cin * Cout),            # conv computed in both phases
        transcendentals=int(4 * B * Cout),
        bytes_accessed=int(B * s_pad * (x_hbm_reads * Cin + Cout) * itemsize
                           + 2 * B * weight_bytes))

    vmem_limit = int(min(vmem_cap, max(workset + (8 << 20), 32 << 20)))

    out = pl.pallas_call(
        kernel,
        out_shape=jax.ShapeDtypeStruct((B, Cout, s_pad), io_dt),
        grid=(B, 2, n_s),
        in_specs=[
            x_spec,
            wspec(wc_k), wspec(bc),
            wspec(wg1), wspec(bg1), wspec(wg2), wspec(bg2),
            wspec(wb1), wspec(bb1), wspec(wb2), wspec(bb2),
        ],
        # INVARIANT (do not change without re-checking): phase 0 pins the
        # output block to (b,0,0), the exact block phase-1/s==0 writes first,
        # so the never-written phase-0 buffer is never flushed and each output
        # tile is written to HBM exactly once.
        out_specs=pl.BlockSpec((None, Cout, ts), lambda b, p, s: (b, 0, p * s)),
        scratch_shapes=[
            pltpu.VMEM((Cout, 1), jnp.float32),   # running sum
            pltpu.VMEM((Cout, 1), jnp.float32),   # running sum of squares
            pltpu.VMEM((Cout, 1), jnp.float32),   # folded scale = gamma/std
            pltpu.VMEM((Cout, 1), jnp.float32),   # folded shift = beta - gamma*mu/std
        ],
        compiler_params=pltpu.CompilerParams(
            dimension_semantics=("parallel", "arbitrary", "arbitrary"),
            vmem_limit_bytes=vmem_limit),
        cost_estimate=cost,
    )(x, wc_k, bc, wg1, bg1, wg2, bg2, wb1, bb1, wb2, bb2)

    if s_pad != S:
        out = out[:, :, :S]
    return out.reshape(B, Cout, D, H, W)


def make_params(key, in_channels, out_channels, reduction=2):
    cr = out_channels // reduction
    ks = jax.random.split(key, 10)
    sd = lambda fan_in: 1.0 / jnp.sqrt(jnp.float32(fan_in))
    # conv:   wc[o, i] == PyTorch conv.weight[o, i, 0, 0, 0]
    wc = jax.random.normal(ks[0], (out_channels, in_channels), jnp.float32) * sd(in_channels)
    bc = jax.random.normal(ks[1], (out_channels, 1), jnp.float32) * sd(in_channels)
    # SE gamma branch: wg1[o, r] == gamma.conv1.weight[r, o], wg2[o, r] == gamma.conv2.weight[o, r]
    wg1 = jax.random.normal(ks[2], (out_channels, cr), jnp.float32) * sd(out_channels)
    bg1 = jax.random.normal(ks[3], (1, cr), jnp.float32) * sd(out_channels)
    wg2 = jax.random.normal(ks[4], (out_channels, cr), jnp.float32) * sd(cr)
    bg2 = jax.random.normal(ks[5], (out_channels, 1), jnp.float32) * sd(cr)
    # SE beta branch
    wb1 = jax.random.normal(ks[6], (out_channels, cr), jnp.float32) * sd(out_channels)
    bb1 = jax.random.normal(ks[7], (1, cr), jnp.float32) * sd(out_channels)
    wb2 = jax.random.normal(ks[8], (out_channels, cr), jnp.float32) * sd(cr)
    bb2 = jax.random.normal(ks[9], (out_channels, 1), jnp.float32) * sd(cr)
    return (wc, bc, wg1, bg1, wg2, bg2, wb1, bb1, wb2, bb2)


def reference(x_ncdhw, params):
    """Pure-JAX reference matching the PyTorch forward semantics."""
    (wc, bc, wg1, bg1, wg2, bg2, wb1, bb1, wb2, bb2) = params
    B, Cin, D, H, W = x_ncdhw.shape
    x = x_ncdhw.reshape(B, Cin, -1)                                    # [B, Cin, S]
    y = jnp.einsum('oi,bis->bos', wc, x) + bc[None, :, :]              # [B, Cout, S]
    y = jnp.maximum(y, 0.0)
    mu = y.mean(axis=-1)                                               # [B, Cout]
    var = y.var(axis=-1)                                               # biased
    hg = jnp.maximum(jnp.einsum('or,bo->br', wg1, mu) + bg1[0], 0.0)
    gamma = jax.nn.sigmoid(jnp.einsum('or,br->bo', wg2, hg) + bg2[:, 0])
    hb = jnp.maximum(jnp.einsum('or,bo->br', wb1, mu) + bb1[0], 0.0)
    beta = jnp.tanh(jnp.einsum('or,br->bo', wb2, hb) + bb2[:, 0])
    norm = (y - mu[..., None]) / jnp.sqrt(var[..., None] + EPS)
    out = gamma[..., None] * norm + beta[..., None]
    return out.reshape(B, -1, D, H, W)


if __name__ == "__main__":
    key = jax.random.PRNGKey(0)
    kx, kp = jax.random.split(key)

    B, Cin, Cout, D, H, W = 2, 4, 8, 16, 16, 16          # S = 4096
    x = jax.random.normal(kx, (B, Cin, D, H, W), jnp.float32)
    params = make_params(kp, Cin, Cout, reduction=2)
    ref = jax.block_until_ready(reference(x, params))

    # 1) f32, whole-batch x resident in VMEM (single HBM read of x).
    fn_cached = jax.jit(functools.partial(fast_smooth_se_norm_conv3d,
                                          params=params, tile_cols=1024,
                                          cache_x=True))
    out = jax.block_until_ready(fn_cached(x))
    assert out.shape == (B, Cout, D, H, W), out.shape
    err = float(jnp.max(jnp.abs(out - ref)))
    assert jnp.allclose(out, ref, atol=1e-4, rtol=1e-4), ("cached-x", err)

    # 2) f32, streamed x tiles (fallback when x does not fit the VMEM budget).
    fn_stream = jax.jit(functools.partial(fast_smooth_se_norm_conv3d,
                                          params=params, tile_cols=512,
                                          cache_x=False))
    out = jax.block_until_ready(fn_stream(x))
    err = float(jnp.max(jnp.abs(out - ref)))
    assert jnp.allclose(out, ref, atol=1e-4, rtol=1e-4), ("streamed-x", err)

    # 3) bf16 I/O (halves HBM bytes); conv acc / stats / scale-shift stay f32.
    fn_bf16 = jax.jit(functools.partial(fast_smooth_se_norm_conv3d, params=params))
    out_bf = jax.block_until_ready(fn_bf16(x.astype(jnp.bfloat16)))
    assert out_bf.dtype == jnp.bfloat16
    err = float(jnp.max(jnp.abs(out_bf.astype(jnp.float32) - ref)))
    assert err < 0.1, ("bf16", err)

    # 4) spatial size not divisible by 128 -> padded + lane-masked stats path.
    D2, H2, W2 = 5, 6, 7                                 # S = 210
    x2 = jax.random.normal(kx, (B, Cin, D2, H2, W2), jnp.float32)
    ref2 = jax.block_until_ready(reference(x2, params))
    fn_odd = jax.jit(functools.partial(fast_smooth_se_norm_conv3d,
                                       params=params, tile_cols=128,
                                       cache_x=False))
    out2 = jax.block_until_ready(fn_odd(x2))
    err = float(jnp.max(jnp.abs(out2 - ref2)))
    assert jnp.allclose(out2, ref2, atol=1e-4, rtol=1e-4), ("masked", err)

    print("KERNEL_OK")
</pallas_src>

<mosaic_0001>
module attributes {stable_mosaic.version = 11 : i64} {
  func.func @_se_norm_conv_kernel(%arg0: i32, %arg1: i32, %arg2: i32, %arg3: memref<1x4x4096xf32, #tpu.memory_space<vmem>>, %arg4: memref<8x4xf32, #tpu.memory_space<vmem>>, %arg5: memref<8x1xf32, #tpu.memory_space<vmem>>, %arg6: memref<8x4xf32, #tpu.memory_space<vmem>>, %arg7: memref<1x4xf32, #tpu.memory_space<vmem>>, %arg8: memref<8x4xf32, #tpu.memory_space<vmem>>, %arg9: memref<8x1xf32, #tpu.memory_space<vmem>>, %arg10: memref<8x4xf32, #tpu.memory_space<vmem>>, %arg11: memref<1x4xf32, #tpu.memory_space<vmem>>, %arg12: memref<8x4xf32, #tpu.memory_space<vmem>>, %arg13: memref<8x1xf32, #tpu.memory_space<vmem>>, %arg14: memref<1x8x1024xf32, #tpu.memory_space<vmem>>, %arg15: memref<8x1xf32, #tpu.memory_space<vmem>>, %arg16: memref<8x1xf32, #tpu.memory_space<vmem>>, %arg17: memref<8x1xf32, #tpu.memory_space<vmem>>, %arg18: memref<8x1xf32, #tpu.memory_space<vmem>>) attributes {dimension_semantics = [#tpu.dimension_semantics<parallel>, #tpu.dimension_semantics<arbitrary>, #tpu.dimension_semantics<arbitrary>], iteration_bounds = array<i64: 2, 2, 4>, scalar_prefetch = 0 : i64, scratch_operands = 4 : i64, tpu.core_type = #tpu.core_type<tc>, window_params = [{transform_indices = @transform_0, window_bounds = array<i64: 1, 4, 4096>}, {pipeline_mode = #tpu.pipeline_mode<synchronous>, transform_indices = @transform_1, window_bounds = array<i64: 8, 4>}, {pipeline_mode = #tpu.pipeline_mode<synchronous>, transform_indices = @transform_2, window_bounds = array<i64: 8, 1>}, {pipeline_mode = #tpu.pipeline_mode<synchronous>, transform_indices = @transform_3, window_bounds = array<i64: 8, 4>}, {pipeline_mode = #tpu.pipeline_mode<synchronous>, transform_indices = @transform_4, window_bounds = array<i64: 1, 4>}, {pipeline_mode = #tpu.pipeline_mode<synchronous>, transform_indices = @transform_5, window_bounds = array<i64: 8, 4>}, {pipeline_mode = #tpu.pipeline_mode<synchronous>, transform_indices = @transform_6, window_bounds = array<i64: 8, 1>}, {pipeline_mode = #tpu.pipeline_mode<synchronous>, transform_indices = @transform_7, window_bounds = array<i64: 8, 4>}, {pipeline_mode = #tpu.pipeline_mode<synchronous>, transform_indices = @transform_8, window_bounds = array<i64: 1, 4>}, {pipeline_mode = #tpu.pipeline_mode<synchronous>, transform_indices = @transform_9, window_bounds = array<i64: 8, 4>}, {pipeline_mode = #tpu.pipeline_mode<synchronous>, transform_indices = @transform_10, window_bounds = array<i64: 8, 1>}, {transform_indices = @transform_11, window_bounds = array<i64: 1, 8, 1024>}]} {
    %c0_i32 = arith.constant 0 : i32
    %0 = arith.cmpi eq, %arg1, %c0_i32 : i32
    %c0_i32_0 = arith.constant 0 : i32
    %1 = arith.cmpi eq, %arg2, %c0_i32_0 : i32
    %2 = arith.andi %0, %1 : i1
    %3 = arith.extui %2 : i1 to i32
    %c0_i32_1 = arith.constant 0 : i32
    %4 = arith.cmpi ne, %3, %c0_i32_1 : i32
    scf.if %4 {
      %cst = arith.constant 0.000000e+00 : f32
      %16 = vector.broadcast %cst : f32 to vector<8x1xf32>
      %c0 = arith.constant 0 : index
      %c0_7 = arith.constant 0 : index
      %17 = vector.load %arg15[%c0, %c0_7] : memref<8x1xf32, #tpu.memory_space<vmem>>, vector<8x1xf32>
      tpu.vector_store %arg15[%c0, %c0_7], %16 {strides = array<i32>} : memref<8x1xf32, #tpu.memory_space<vmem>>, vector<8x1xf32>,
      %cst_8 = arith.constant 0.000000e+00 : f32
      %18 = vector.broadcast %cst_8 : f32 to vector<8x1xf32>
      %c0_9 = arith.constant 0 : index
      %c0_10 = arith.constant 0 : index
      %19 = vector.load %arg16[%c0_9, %c0_10] : memref<8x1xf32, #tpu.memory_space<vmem>>, vector<8x1xf32>
      tpu.vector_store %arg16[%c0_9, %c0_10], %18 {strides = array<i32>} : memref<8x1xf32, #tpu.memory_space<vmem>>, vector<8x1xf32>,
    } else {
    }
    %c0_i32_2 = arith.constant 0 : i32
    %5 = arith.cmpi eq, %arg1, %c0_i32_2 : i32
    %6 = arith.extui %5 : i1 to i32
    %c0_i32_3 = arith.constant 0 : i32
    %7 = arith.cmpi ne, %6, %c0_i32_3 : i32
    scf.if %7 {
      %c1024_i32 = arith.constant 1024 : i32
      %16 = arith.muli %arg2, %c1024_i32 : i32
      %17 = tpu.assume_multiple %16, 1024 : i32
      %c0 = arith.constant 0 : index
      %c0_7 = arith.constant 0 : index
      %18 = arith.index_cast %17 : i32 to index
      %19 = vector.load %arg3[%c0, %c0_7, %18] : memref<1x4x4096xf32, #tpu.memory_space<vmem>>, vector<1x4x1024xf32>
      %20 = vector.shape_cast %19 : vector<1x4x1024xf32> to vector<4x1024xf32>
      %c0_8 = arith.constant 0 : index
      %c0_9 = arith.constant 0 : index
      %21 = vector.load %arg4[%c0_8, %c0_9] : memref<8x4xf32, #tpu.memory_space<vmem>>, vector<8x4xf32>
      %cst = arith.constant dense<0.000000e+00> : vector<8x1024xf32>
      %22 = tpu.matmul %21, %20, %cst {dimension_numbers = #tpu.dot_dimension_numbers<[1], [0], [0], [1], [0, 0, 1, 1], [], []>} : vector<8x4xf32>, vector<4x1024xf32>, vector<8x1024xf32> -> vector<8x1024xf32>
      %c0_10 = arith.constant 0 : index
      %c0_11 = arith.constant 0 : index
      %23 = vector.load %arg5[%c0_10, %c0_11] : memref<8x1xf32, #tpu.memory_space<vmem>>, vector<8x1xf32>
      %24 = vector.broadcast %23 : vector<8x1xf32> to vector<8x1024xf32>
      %25 = arith.addf %22, %24 : vector<8x1024xf32>
      %cst_12 = arith.constant 0.000000e+00 : f32
      %26 = vector.broadcast %cst_12 : f32 to vector<8x1024xf32>
      %27 = arith.maximumf %25, %26 : vector<8x1024xf32>
      %c0_13 = arith.constant 0 : index
      %c0_14 = arith.constant 0 : index
      %28 = vector.load %arg15[%c0_13, %c0_14] : memref<8x1xf32, #tpu.memory_space<vmem>>, vector<8x1xf32>
      %cst_15 = arith.constant dense<0.000000e+00> : vector<8xf32>
      %29 = vector.multi_reduction <add>, %27, %cst_15 [1] : vector<8x1024xf32> to vector<8xf32>
      %30 = vector.shape_cast %29 : vector<8xf32> to vector<8x1xf32>
      %31 = arith.addf %28, %30 : vector<8x1xf32>
      %c0_16 = arith.constant 0 : index
      %c0_17 = arith.constant 0 : index
      %32 = vector.load %arg15[%c0_16, %c0_17] : memref<8x1xf32, #tpu.memory_space<vmem>>, vector<8x1xf32>
      tpu.vector_store %arg15[%c0_16, %c0_17], %31 {strides = array<i32>} : memref<8x1xf32, #tpu.memory_space<vmem>>, vector<8x1xf32>,
      %c0_18 = arith.constant 0 : index
      %c0_19 = arith.constant 0 : index
      %33 = vector.load %arg16[%c0_18, %c0_19] : memref<8x1xf32, #tpu.memory_space<vmem>>, vector<8x1xf32>
      %34 = arith.mulf %27, %27 : vector<8x1024xf32>
      %cst_20 = arith.constant dense<0.000000e+00> : vector<8xf32>
      %35 = vector.multi_reduction <add>, %34, %cst_20 [1] : vector<8x1024xf32> to vector<8xf32>
      %36 = vector.shape_cast %35 : vector<8xf32> to vector<8x1xf32>
      %37 = arith.addf %33, %36 : vector<8x1xf32>
      %c0_21 = arith.constant 0 : index
      %c0_22 = arith.constant 0 : index
      %38 = vector.load %arg16[%c0_21, %c0_22] : memref<8x1xf32, #tpu.memory_space<vmem>>, vector<8x1xf32>
      tpu.vector_store %arg16[%c0_21, %c0_22], %37 {strides = array<i32>} : memref<8x1xf32, #tpu.memory_space<vmem>>, vector<8x1xf32>,
    } else {
    }
    %c0_i32_4 = arith.constant 0 : i32
    %8 = arith.cmpi eq, %arg1, %c0_i32_4 : i32
    %c3_i32 = arith.constant 3 : i32
    %9 = arith.cmpi eq, %arg2, %c3_i32 : i32
    %10 = arith.andi %8, %9 : i1
    %11 = arith.extui %10 : i1 to i32
    %c0_i32_5 = arith.constant 0 : i32
    %12 = arith.cmpi ne, %11, %c0_i32_5 : i32
    scf.if %12 {
      %c0 = arith.constant 0 : index
      %c0_7 = arith.constant 0 : index
      %16 = vector.load %arg15[%c0, %c0_7] : memref<8x1xf32, #tpu.memory_space<vmem>>, vector<8x1xf32>
      %cst = arith.constant 2.44140625E-4 : f32
      %17 = vector.broadcast %cst : f32 to vector<8x1xf32>
      %18 = arith.mulf %16, %17 : vector<8x1xf32>
      %c0_8 = arith.constant 0 : index
      %c0_9 = arith.constant 0 : index
      %19 = vector.load %arg16[%c0_8, %c0_9] : memref<8x1xf32, #tpu.memory_space<vmem>>, vector<8x1xf32>
      %cst_10 = arith.constant 2.44140625E-4 : f32
      %20 = vector.broadcast %cst_10 : f32 to vector<8x1xf32>
      %21 = arith.mulf %19, %20 : vector<8x1xf32>
      %22 = arith.mulf %18, %18 : vector<8x1xf32>
      %23 = arith.subf %21, %22 : vector<8x1xf32>
      %cst_11 = arith.constant 0.000000e+00 : f32
      %24 = vector.broadcast %cst_11 : f32 to vector<8x1xf32>
      %25 = arith.maximumf %23, %24 : vector<8x1xf32>
      %c0_12 = arith.constant 0 : index
      %c0_13 = arith.constant 0 : index
      %26 = vector.load %arg6[%c0_12, %c0_13] : memref<8x4xf32, #tpu.memory_space<vmem>>, vector<8x4xf32>
      %27 = vector.broadcast %18 : vector<8x1xf32> to vector<8x4xf32>
      %28 = arith.mulf %26, %27 : vector<8x4xf32>
      %cst_14 = arith.constant dense<0.000000e+00> : vector<4xf32>
      %29 = vector.multi_reduction <add>, %28, %cst_14 [0] : vector<8x4xf32> to vector<4xf32>
      %30 = vector.shape_cast %29 : vector<4xf32> to vector<1x4xf32>
      %c0_15 = arith.constant 0 : index
      %c0_16 = arith.constant 0 : index
      %31 = vector.load %arg7[%c0_15, %c0_16] : memref<1x4xf32, #tpu.memory_space<vmem>>, vector<1x4xf32>
      %32 = arith.addf %30, %31 : vector<1x4xf32>
      %cst_17 = arith.constant 0.000000e+00 : f32
      %33 = vector.broadcast %cst_17 : f32 to vector<1x4xf32>
      %34 = arith.maximumf %32, %33 : vector<1x4xf32>
      %c0_18 = arith.constant 0 : index
      %c0_19 = arith.constant 0 : index
      %35 = vector.load %arg8[%c0_18, %c0_19] : memref<8x4xf32, #tpu.memory_space<vmem>>, vector<8x4xf32>
      %36 = vector.broadcast %34 : vector<1x4xf32> to vector<8x4xf32>
      %37 = arith.mulf %35, %36 : vector<8x4xf32>
      %cst_20 = arith.constant dense<0.000000e+00> : vector<8xf32>
      %38 = vector.multi_reduction <add>, %37, %cst_20 [1] : vector<8x4xf32> to vector<8xf32>
      %39 = vector.shape_cast %38 : vector<8xf32> to vector<8x1xf32>
      %c0_21 = arith.constant 0 : index
      %c0_22 = arith.constant 0 : index
      %40 = vector.load %arg9[%c0_21, %c0_22] : memref<8x1xf32, #tpu.memory_space<vmem>>, vector<8x1xf32>
      %41 = arith.addf %39, %40 : vector<8x1xf32>
      %42 = arith.negf %41 : vector<8x1xf32>
      %43 = math.exp %42 : vector<8x1xf32>
      %cst_23 = arith.constant 1.000000e+00 : f32
      %44 = vector.broadcast %cst_23 : f32 to vector<8x1xf32>
      %45 = arith.addf %44, %43 : vector<8x1xf32>
      %46 = arith.divf %44, %45 : vector<8x1xf32>
      %c0_24 = arith.constant 0 : index
      %c0_25 = arith.constant 0 : index
      %47 = vector.load %arg10[%c0_24, %c0_25] : memref<8x4xf32, #tpu.memory_space<vmem>>, vector<8x4xf32>
      %48 = vector.broadcast %18 : vector<8x1xf32> to vector<8x4xf32>
      %49 = arith.mulf %47, %48 : vector<8x4xf32>
      %cst_26 = arith.constant dense<0.000000e+00> : vector<4xf32>
      %50 = vector.multi_reduction <add>, %49, %cst_26 [0] : vector<8x4xf32> to vector<4xf32>
      %51 = vector.shape_cast %50 : vector<4xf32> to vector<1x4xf32>
      %c0_27 = arith.constant 0 : index
      %c0_28 = arith.constant 0 : index
      %52 = vector.load %arg11[%c0_27, %c0_28] : memref<1x4xf32, #tpu.memory_space<vmem>>, vector<1x4xf32>
      %53 = arith.addf %51, %52 : vector<1x4xf32>
      %cst_29 = arith.constant 0.000000e+00 : f32
      %54 = vector.broadcast %cst_29 : f32 to vector<1x4xf32>
      %55 = arith.maximumf %53, %54 : vector<1x4xf32>
      %c0_30 = arith.constant 0 : index
      %c0_31 = arith.constant 0 : index
      %56 = vector.load %arg12[%c0_30, %c0_31] : memref<8x4xf32, #tpu.memory_space<vmem>>, vector<8x4xf32>
      %57 = vector.broadcast %55 : vector<1x4xf32> to vector<8x4xf32>
      %58 = arith.mulf %56, %57 : vector<8x4xf32>
      %cst_32 = arith.constant dense<0.000000e+00> : vector<8xf32>
      %59 = vector.multi_reduction <add>, %58, %cst_32 [1] : vector<8x4xf32> to vector<8xf32>
      %60 = vector.shape_cast %59 : vector<8xf32> to vector<8x1xf32>
      %c0_33 = arith.constant 0 : index
      %c0_34 = arith.constant 0 : index
      %61 = vector.load %arg13[%c0_33, %c0_34] : memref<8x1xf32, #tpu.memory_space<vmem>>, vector<8x1xf32>
      %62 = arith.addf %60, %61 : vector<8x1xf32>
      %63 = math.tanh %62 : vector<8x1xf32>
      %cst_35 = arith.constant 9.99999974E-6 : f32
      %64 = vector.broadcast %cst_35 : f32 to vector<8x1xf32>
      %65 = arith.addf %25, %64 : vector<8x1xf32>
      %66 = math.rsqrt %65 : vector<8x1xf32>
      %67 = arith.mulf %46, %66 : vector<8x1xf32>
      %c0_36 = arith.constant 0 : index
      %c0_37 = arith.constant 0 : index
      %68 = vector.load %arg17[%c0_36, %c0_37] : memref<8x1xf32, #tpu.memory_space<vmem>>, vector<8x1xf32>
      tpu.vector_store %arg17[%c0_36, %c0_37], %67 {strides = array<i32>} : memref<8x1xf32, #tpu.memory_space<vmem>>, vector<8x1xf32>,
      %69 = arith.mulf %46, %18 : vector<8x1xf32>
      %70 = arith.mulf %69, %66 : vector<8x1xf32>
      %71 = arith.subf %63, %70 : vector<8x1xf32>
      %c0_38 = arith.constant 0 : index
      %c0_39 = arith.constant 0 : index
      %72 = vector.load %arg18[%c0_38, %c0_39] : memref<8x1xf32, #tpu.memory_space<vmem>>, vector<8x1xf32>
      tpu.vector_store %arg18[%c0_38, %c0_39], %71 {strides = array<i32>} : memref<8x1xf32, #tpu.memory_space<vmem>>, vector<8x1xf32>,
    } else {
    }
    %c1_i32 = arith.constant 1 : i32
    %13 = arith.cmpi eq, %arg1, %c1_i32 : i32
    %14 = arith.extui %13 : i1 to i32
    %c0_i32_6 = arith.constant 0 : i32
    %15 = arith.cmpi ne, %14, %c0_i32_6 : i32
    scf.if %15 {
      %c1024_i32 = arith.constant 1024 : i32
      %16 = arith.muli %arg2, %c1024_i32 : i32
      %17 = tpu.assume_multiple %16, 1024 : i32
      %c0 = arith.constant 0 : index
      %c0_7 = arith.constant 0 : index
      %18 = arith.index_cast %17 : i32 to index
      %19 = vector.load %arg3[%c0, %c0_7, %18] : memref<1x4x4096xf32, #tpu.memory_space<vmem>>, vector<1x4x1024xf32>
      %20 = vector.shape_cast %19 : vector<1x4x1024xf32> to vector<4x1024xf32>
      %c0_8 = arith.constant 0 : index
      %c0_9 = arith.constant 0 : index
      %21 = vector.load %arg4[%c0_8, %c0_9] : memref<8x4xf32, #tpu.memory_space<vmem>>, vector<8x4xf32>
      %cst = arith.constant dense<0.000000e+00> : vector<8x1024xf32>
      %22 = tpu.matmul %21, %20, %cst {dimension_numbers = #tpu.dot_dimension_numbers<[1], [0], [0], [1], [0, 0, 1, 1], [], []>} : vector<8x4xf32>, vector<4x1024xf32>, vector<8x1024xf32> -> vector<8x1024xf32>
      %c0_10 = arith.constant 0 : index
      %c0_11 = arith.constant 0 : index
      %23 = vector.load %arg5[%c0_10, %c0_11] : memref<8x1xf32, #tpu.memory_space<vmem>>, vector<8x1xf32>
      %24 = vector.broadcast %23 : vector<8x1xf32> to vector<8x1024xf32>
      %25 = arith.addf %22, %24 : vector<8x1024xf32>
      %cst_12 = arith.constant 0.000000e+00 : f32
      %26 = vector.broadcast %cst_12 : f32 to vector<8x1024xf32>
      %27 = arith.maximumf %25, %26 : vector<8x1024xf32>
      %c0_13 = arith.constant 0 : index
      %c0_14 = arith.constant 0 : index
      %28 = vector.load %arg17[%c0_13, %c0_14] : memref<8x1xf32, #tpu.memory_space<vmem>>, vector<8x1xf32>
      %29 = vector.broadcast %28 : vector<8x1xf32> to vector<8x1024xf32>
      %30 = arith.mulf %27, %29 : vector<8x1024xf32>
      %c0_15 = arith.constant 0 : index
      %c0_16 = arith.constant 0 : index
      %31 = vector.load %arg18[%c0_15, %c0_16] : memref<8x1xf32, #tpu.memory_space<vmem>>, vector<8x1xf32>
      %32 = vector.broadcast %31 : vector<8x1xf32> to vector<8x1024xf32>
      %33 = arith.addf %30, %32 : vector<8x1024xf32>
      %c0_17 = arith.constant 0 : index
      %c0_18 = arith.constant 0 : index
      %c0_19 = arith.constant 0 : index
      %34 = vector.load %arg14[%c0_17, %c0_18, %c0_19] : memref<1x8x1024xf32, #tpu.memory_space<vmem>>, vector<1x8x1024xf32>
      %35 = vector.shape_cast %34 : vector<1x8x1024xf32> to vector<8x1024xf32>
      %36 = vector.shape_cast %33 : vector<8x1024xf32> to vector<1x8x1024xf32>
      tpu.vector_store %arg14[%c0_17, %c0_18, %c0_19], %36 {strides = array<i32>} : memref<1x8x1024xf32, #tpu.memory_space<vmem>>, vector<1x8x1024xf32>,
    } else {
    }
    return
  }
  func.func @transform_0(%arg0: i32, %arg1: i32, %arg2: i32) -> (i32, i32, i32) {
    %c0_i32 = arith.constant 0 : i32
    %c0_i32_0 = arith.constant 0 : i32
    %c0_i32_1 = arith.constant 0 : i32
    return %arg0, %c0_i32, %c0_i32_0 : i32, i32, i32
  }
  func.func @transform_1(%arg0: i32, %arg1: i32, %arg2: i32) -> (i32, i32) {
    %c0_i32 = arith.constant 0 : i32
    %c0_i32_0 = arith.constant 0 : i32
    %c0_i32_1 = arith.constant 0 : i32
    return %c0_i32, %c0_i32_0 : i32, i32
  }
  func.func @transform_2(%arg0: i32, %arg1: i32, %arg2: i32) -> (i32, i32) {
    %c0_i32 = arith.constant 0 : i32
    %c0_i32_0 = arith.constant 0 : i32
    %c0_i32_1 = arith.constant 0 : i32
    return %c0_i32, %c0_i32_0 : i32, i32
  }
  func.func @transform_3(%arg0: i32, %arg1: i32, %arg2: i32) -> (i32, i32) {
    %c0_i32 = arith.constant 0 : i32
    %c0_i32_0 = arith.constant 0 : i32
    %c0_i32_1 = arith.constant 0 : i32
    return %c0_i32, %c0_i32_0 : i32, i32
  }
  func.func @transform_4(%arg0: i32, %arg1: i32, %arg2: i32) -> (i32, i32) {
    %c0_i32 = arith.constant 0 : i32
    %c0_i32_0 = arith.constant 0 : i32
    %c0_i32_1 = arith.constant 0 : i32
    return %c0_i32, %c0_i32_0 : i32, i32
  }
  func.func @transform_5(%arg0: i32, %arg1: i32, %arg2: i32) -> (i32, i32) {
    %c0_i32 = arith.constant 0 : i32
    %c0_i32_0 = arith.constant 0 : i32
    %c0_i32_1 = arith.constant 0 : i32
    return %c0_i32, %c0_i32_0 : i32, i32
  }
  func.func @transform_6(%arg0: i32, %arg1: i32, %arg2: i32) -> (i32, i32) {
    %c0_i32 = arith.constant 0 : i32
    %c0_i32_0 = arith.constant 0 : i32
    %c0_i32_1 = arith.constant 0 : i32
    return %c0_i32, %c0_i32_0 : i32, i32
  }
  func.func @transform_7(%arg0: i32, %arg1: i32, %arg2: i32) -> (i32, i32) {
    %c0_i32 = arith.constant 0 : i32
    %c0_i32_0 = arith.constant 0 : i32
    %c0_i32_1 = arith.constant 0 : i32
    return %c0_i32, %c0_i32_0 : i32, i32
  }
  func.func @transform_8(%arg0: i32, %arg1: i32, %arg2: i32) -> (i32, i32) {
    %c0_i32 = arith.constant 0 : i32
    %c0_i32_0 = arith.constant 0 : i32
    %c0_i32_1 = arith.constant 0 : i32
    return %c0_i32, %c0_i32_0 : i32, i32
  }
  func.func @transform_9(%arg0: i32, %arg1: i32, %arg2: i32) -> (i32, i32) {
    %c0_i32 = arith.constant 0 : i32
    %c0_i32_0 = arith.constant 0 : i32
    %c0_i32_1 = arith.constant 0 : i32
    return %c0_i32, %c0_i32_0 : i32, i32
  }
  func.func @transform_10(%arg0: i32, %arg1: i32, %arg2: i32) -> (i32, i32) {
    %c0_i32 = arith.constant 0 : i32
    %c0_i32_0 = arith.constant 0 : i32
    %c0_i32_1 = arith.constant 0 : i32
    return %c0_i32, %c0_i32_0 : i32, i32
  }
  func.func @transform_11(%arg0: i32, %arg1: i32, %arg2: i32) -> (i32, i32, i32) {
    %0 = arith.muli %arg1, %arg2 : i32
    %c0_i32 = arith.constant 0 : i32
    %c0_i32_0 = arith.constant 0 : i32
    return %arg0, %c0_i32, %0 : i32, i32, i32
  }
}

</mosaic_0001>

<llo_original>
// kernel: fast_smooth_se_norm_conv3d.1
$region0: #{fast_smooth_se_norm_conv3d.1}
  #allocation0 [shape = 'u32[]', space=smem, size = 0x4, offset = 0x4, fixed_abs, tag = 'smem constant byte address 0x4 - core index']
  #allocation1 [shape = 'u32[144,128]{1,0:T(1,128)}', space=vmem, size = 0x12000, scoped, tag = 'internal scratch']
  #allocation2 [shape = 'f32[8,1]{1,0:T(8,128)}', space=vmem, size = 0x1000, scoped, tag = 'scratch operand']
  #allocation3 [shape = 'f32[8,1]{1,0:T(8,128)}', space=vmem, size = 0x1000, scoped, tag = 'scratch operand']
  #allocation4 [shape = 'f32[8,1]{1,0:T(8,128)}', space=vmem, size = 0x1000, scoped, tag = 'scratch operand']
  #allocation5 [shape = 'f32[8,1]{1,0:T(8,128)}', space=vmem, size = 0x1000, scoped, tag = 'scratch operand']
  %s0 = inlined_call_operand.vmem [shape: f32[2,4,4096], index: 0, kind: input, shape index: {}]
  %s1 = inlined_call_operand.hbm [shape: f32[8,4], index: 1, kind: input, shape index: {}]
  %s2 = inlined_call_operand.hbm [shape: f32[8,1], index: 2, kind: input, shape index: {}]
  %s3 = inlined_call_operand.hbm [shape: f32[8,4], index: 3, kind: input, shape index: {}]
  %s4 = inlined_call_operand.hbm [shape: f32[1,4], index: 4, kind: input, shape index: {}]
  %s5 = inlined_call_operand.hbm [shape: f32[8,4], index: 5, kind: input, shape index: {}]
  %s6 = inlined_call_operand.hbm [shape: f32[8,1], index: 6, kind: input, shape index: {}]
  %s7 = inlined_call_operand.hbm [shape: f32[8,4], index: 7, kind: input, shape index: {}]
  %s8 = inlined_call_operand.hbm [shape: f32[1,4], index: 8, kind: input, shape index: {}]
  %s9 = inlined_call_operand.hbm [shape: f32[8,4], index: 9, kind: input, shape index: {}]
  %s10 = inlined_call_operand.hbm [shape: f32[8,1], index: 10, kind: input, shape index: {}]
  %s11 = inlined_call_operand.vmem [shape: f32[2,8,4096], index: 11, kind: output, shape index: {}]
  %s12 = sld [smem:[#allocation0]]
  $region133: #{fast_smooth_se_norm_conv3d.1} parent=0
    _
  %s14 = ssub.s32 1, %s12
  %s15 = scalar_select 0, %s14, %s12
  $region1: #{fast_smooth_se_norm_conv3d.1} parent=0
    #allocation6 [shape = 'u8[4096]{0}', space=vmem, size = 0x1000, scoped, tag = 'input window, operand 1, single buffered']
    #allocation7 [shape = 's32[2]{0}', space=sflag, size = 0x8, scoped, tag = 'scoped memory for fast_smooth_se_norm_conv3d.1']
    #allocation8 [shape = 'u8[4096]{0}', space=vmem, size = 0x1000, scoped, tag = 'input window, operand 2, single buffered']
    #allocation9 [shape = 's32[1]{0}', space=sflag, size = 0x4, scoped, tag = 'scoped memory for fast_smooth_se_norm_conv3d.1']
    #allocation10 [shape = 'u8[4096]{0}', space=vmem, size = 0x1000, scoped, tag = 'input window, operand 3, single buffered']
    #allocation11 [shape = 'u8[512]{0}', space=vmem, size = 0x400, scoped, tag = 'input window, operand 4, single buffered']
    #allocation12 [shape = 's32[1]{0}', space=sflag, size = 0x4, scoped, tag = 'scoped memory for fast_smooth_se_norm_conv3d.1']
    #allocation13 [shape = 'u8[4096]{0}', space=vmem, size = 0x1000, scoped, tag = 'input window, operand 5, single buffered']
    #allocation14 [shape = 'u8[4096]{0}', space=vmem, size = 0x1000, scoped, tag = 'input window, operand 6, single buffered']
    #allocation15 [shape = 's32[1]{0}', space=sflag, size = 0x4, scoped, tag = 'scoped memory for fast_smooth_se_norm_conv3d.1']
    #allocation16 [shape = 'u8[4096]{0}', space=vmem, size = 0x1000, scoped, tag = 'input window, operand 7, single buffered']
    #allocation17 [shape = 'u8[512]{0}', space=vmem, size = 0x400, scoped, tag = 'input window, operand 8, single buffered']
    #allocation18 [shape = 's32[1]{0}', space=sflag, size = 0x4, scoped, tag = 'scoped memory for fast_smooth_se_norm_conv3d.1']
    #allocation19 [shape = 'u8[4096]{0}', space=vmem, size = 0x1000, scoped, tag = 'input window, operand 9, single buffered']
    #allocation20 [shape = 'u8[4096]{0}', space=vmem, size = 0x1000, scoped, tag = 'input window, operand 10, single buffered']
    #allocation21 [shape = 's32[1]{0}', space=sflag, size = 0x4, scoped, tag = 'scoped memory for fast_smooth_se_norm_conv3d.1']
    %16 = vsyncpa [#allocation7], 0
    %17 = vsyncpa [#allocation9], 0
    %18 = vsyncpa [#allocation12], 0
    %19 = vsyncpa [#allocation15], 0
    %20 = vsyncpa [#allocation18], 0
    %21 = vsyncpa [#allocation21], 0
    loop: start=0, step=1, limit=18
    $region2: #{fast_smooth_se_norm_conv3d.1} parent=1 // loop_pre_header
      _
    $region3: #{fast_smooth_se_norm_conv3d.1} parent=1 // loop_header
      %s23 = sphi 0, %s27
      %p24 = scmp.ge.s32.totalorder %s23, 18
      %s30 = sphi 0, %s49
      %s31 = sphi 0, %s45
      %s32 = sphi 0, %s41
      %s33 = sphi 0, %s30
      %s34 = sphi 0, %s31
      %s35 = sphi 0, %s32
      %s36 = sphi 0, %s33
      %s37 = sphi 0, %s34
      %s38 = sphi 0, %s35
      %s52 = sphi 0, %s54
      %s55 = sphi 0, %s52
      %s56 = sphi 0, %s55
      %s72 = sphi 0, %s56
      %s76 = sphi 0, %s76
      %s78 = sphi 0, %s76
      %s79 = sphi 0, %s78
      %s93 = sphi 0, %s79
      %s97 = sphi 0, %s97
      %s99 = sphi 0, %s97
      %s100 = sphi 0, %s99
      %s114 = sphi 0, %s100
      %s118 = sphi 0, %s118
      %s120 = sphi 0, %s118
      %s121 = sphi 0, %s120
      %s135 = sphi 0, %s121
      %s139 = sphi 0, %s139
      %s141 = sphi 0, %s139
      %s142 = sphi 0, %s141
      %s156 = sphi 0, %s142
      %s160 = sphi 0, %s160
      %s162 = sphi 0, %s160
      %s163 = sphi 0, %s162
      %s177 = sphi 0, %s163
      %s181 = sphi 0, %s181
      %s183 = sphi 0, %s181
      %s184 = sphi 0, %s183
      %s198 = sphi 0, %s184
      %s202 = sphi 0, %s202
      %s204 = sphi 0, %s202
      %s205 = sphi 0, %s204
      %s219 = sphi 0, %s205
      %s223 = sphi 0, %s223
      %s225 = sphi 0, %s223
      %s226 = sphi 0, %s225
      %s240 = sphi 0, %s226
      %s244 = sphi 0, %s244
      %s246 = sphi 0, %s244
      %s247 = sphi 0, %s246
      %s261 = sphi 0, %s247
      %s265 = sphi 0, %s265
      %s267 = sphi 0, %s265
      %s268 = sphi 0, %s267
      %s282 = sphi 0, %s268
      %s292 = sphi 0, %s294
      %s295 = sphi 0, %s292
      %s296 = sphi 0, %s295
      %s312 = sphi 0, %s296
    $region4: #{fast_smooth_se_norm_conv3d.1} parent=1 // loop_header_branch
      %26 = sbr.rel (%p24) target = $region8
    $region5: #{fast_smooth_se_norm_conv3d.1} parent=1 // loop_body
      %s28 = ssub.s32 %s23, 1
      %s29 = ssub.s32 %s23, 2
      %s39 = sadd.s32 1, %s32
      %p40 = scmp.ge.s32.totalorder %s39, 4
      %s41 = scalar_select %p40, 0, %s39
      %s42 = sadd.s32 1, %s31
      %s43 = scalar_select %p40, %s42, %s31
      %p44 = scmp.ge.s32.totalorder %s43, 2
      %s45 = scalar_select %p44, 0, %s43
      %s46 = sadd.s32 1, %s30
      %s47 = scalar_select %p44, %s46, %s30
      %p48 = scmp.ge.s32.totalorder %s47, 2
      %s49 = scalar_select %p48, 0, %s47
      %s50 = ssub.s32 %s30, %s49
      %p51 = scmp.eq.s32.totalorder %s50, 0
      %s53 = sadd.s32 %s52, 1
      %s54 = scalar_select %p51, %s52, %s53
      %p57 = pneg %p51
      %p58 = scmp.eq.s32.totalorder %s23, 15
      %p59 = por %p57, %p58
      %p60 = scmp.ne.s32.totalorder %s52, %s55
      %p61 = scmp.eq.s32.totalorder %s23, 0
      %p62 = por %p60, %p61
      %p63 = scmp.ne.s32.totalorder %s52, %s55
      %p64 = scmp.eq.s32.totalorder %s28, 15
      %p65 = por %p63, %p64
      %p66 = scmp.ne.s32.totalorder %s55, %s56
      %p67 = scmp.eq.s32.totalorder %s28, 0
      %p68 = por %p66, %p67
      %p69 = scmp.ne.s32.totalorder %s55, %s56
      %p70 = scmp.eq.s32.totalorder %s29, 15
      %p71 = por %p69, %p70
      %p73 = scmp.ne.s32.totalorder %s56, %s72
      %p74 = scmp.eq.s32.totalorder %s29, 0
      %p75 = por %p73, %p74
      %s77 = sadd.s32 %s76, 1
      %p80 = scmp.eq.s32.totalorder %s23, 15
      %p81 = scmp.ne.s32.totalorder %s76, %s78
      %p82 = scmp.eq.s32.totalorder %s23, 0
      %p83 = por %p81, %p82
      %p84 = scmp.ne.s32.totalorder %s76, %s78
      %p85 = scmp.eq.s32.totalorder %s28, 15
      %p86 = por %p84, %p85
      %p87 = scmp.ne.s32.totalorder %s78, %s79
      %p88 = scmp.eq.s32.totalorder %s28, 0
      %p89 = por %p87, %p88
      %p90 = scmp.ne.s32.totalorder %s78, %s79
      %p91 = scmp.eq.s32.totalorder %s29, 15
      %p92 = por %p90, %p91
      %p94 = scmp.ne.s32.totalorder %s79, %s93
      %p95 = scmp.eq.s32.totalorder %s29, 0
      %p96 = por %p94, %p95
      %s98 = sadd.s32 %s97, 1
      %p101 = scmp.eq.s32.totalorder %s23, 15
      %p102 = scmp.ne.s32.totalorder %s97, %s99
      %p103 = scmp.eq.s32.totalorder %s23, 0
      %p104 = por %p102, %p103
      %p105 = scmp.ne.s32.totalorder %s97, %s99
      %p106 = scmp.eq.s32.totalorder %s28, 15
      %p107 = por %p105, %p106
      %p108 = scmp.ne.s32.totalorder %s99, %s100
      %p109 = scmp.eq.s32.totalorder %s28, 0
      %p110 = por %p108, %p109
      %p111 = scmp.ne.s32.totalorder %s99, %s100
      %p112 = scmp.eq.s32.totalorder %s29, 15
      %p113 = por %p111, %p112
      %p115 = scmp.ne.s32.totalorder %s100, %s114
      %p116 = scmp.eq.s32.totalorder %s29, 0
      %p117 = por %p115, %p116
      %s119 = sadd.s32 %s118, 1
      %p122 = scmp.eq.s32.totalorder %s23, 15
      %p123 = scmp.ne.s32.totalorder %s118, %s120
      %p124 = scmp.eq.s32.totalorder %s23, 0
      %p125 = por %p123, %p124
      %p126 = scmp.ne.s32.totalorder %s118, %s120
      %p127 = scmp.eq.s32.totalorder %s28, 15
      %p128 = por %p126, %p127
      %p129 = scmp.ne.s32.totalorder %s120, %s121
      %p130 = scmp.eq.s32.totalorder %s28, 0
      %p131 = por %p129, %p130
      %p132 = scmp.ne.s32.totalorder %s120, %s121
      %p133 = scmp.eq.s32.totalorder %s29, 15
      %p134 = por %p132, %p133
      %p136 = scmp.ne.s32.totalorder %s121, %s135
      %p137 = scmp.eq.s32.totalorder %s29, 0
      %p138 = por %p136, %p137
      %s140 = sadd.s32 %s139, 1
      %p143 = scmp.eq.s32.totalorder %s23, 15
      %p144 = scmp.ne.s32.totalorder %s139, %s141
      %p145 = scmp.eq.s32.totalorder %s23, 0
      %p146 = por %p144, %p145
      %p147 = scmp.ne.s32.totalorder %s139, %s141
      %p148 = scmp.eq.s32.totalorder %s28, 15
      %p149 = por %p147, %p148
      %p150 = scmp.ne.s32.totalorder %s141, %s142
      %p151 = scmp.eq.s32.totalorder %s28, 0
      %p152 = por %p150, %p151
      %p153 = scmp.ne.s32.totalorder %s141, %s142
      %p154 = scmp.eq.s32.totalorder %s29, 15
      %p155 = por %p153, %p154
      %p157 = scmp.ne.s32.totalorder %s142, %s156
      %p158 = scmp.eq.s32.totalorder %s29, 0
      %p159 = por %p157, %p158
      %s161 = sadd.s32 %s160, 1
      %p164 = scmp.eq.s32.totalorder %s23, 15
      %p165 = scmp.ne.s32.totalorder %s160, %s162
      %p166 = scmp.eq.s32.totalorder %s23, 0
      %p167 = por %p165, %p166
      %p168 = scmp.ne.s32.totalorder %s160, %s162
      %p169 = scmp.eq.s32.totalorder %s28, 15
      %p170 = por %p168, %p169
      %p171 = scmp.ne.s32.totalorder %s162, %s163
      %p172 = scmp.eq.s32.totalorder %s28, 0
      %p173 = por %p171, %p172
      %p174 = scmp.ne.s32.totalorder %s162, %s163
      %p175 = scmp.eq.s32.totalorder %s29, 15
      %p176 = por %p174, %p175
      %p178 = scmp.ne.s32.totalorder %s163, %s177
      %p179 = scmp.eq.s32.totalorder %s29, 0
      %p180 = por %p178, %p179
      %s182 = sadd.s32 %s181, 1
      %p185 = scmp.eq.s32.totalorder %s23, 15
      %p186 = scmp.ne.s32.totalorder %s181, %s183
      %p187 = scmp.eq.s32.totalorder %s23, 0
      %p188 = por %p186, %p187
      %p189 = scmp.ne.s32.totalorder %s181, %s183
      %p190 = scmp.eq.s32.totalorder %s28, 15
      %p191 = por %p189, %p190
      %p192 = scmp.ne.s32.totalorder %s183, %s184
      %p193 = scmp.eq.s32.totalorder %s28, 0
      %p194 = por %p192, %p193
      %p195 = scmp.ne.s32.totalorder %s183, %s184
      %p196 = scmp.eq.s32.totalorder %s29, 15
      %p197 = por %p195, %p196
      %p199 = scmp.ne.s32.totalorder %s184, %s198
      %p200 = scmp.eq.s32.totalorder %s29, 0
      %p201 = por %p199, %p200
      %s203 = sadd.s32 %s202, 1
      %p206 = scmp.eq.s32.totalorder %s23, 15
      %p207 = scmp.ne.s32.totalorder %s202, %s204
      %p208 = scmp.eq.s32.totalorder %s23, 0
      %p209 = por %p207, %p208
      %p210 = scmp.ne.s32.totalorder %s202, %s204
      %p211 = scmp.eq.s32.totalorder %s28, 15
      %p212 = por %p210, %p211
      %p213 = scmp.ne.s32.totalorder %s204, %s205
      %p214 = scmp.eq.s32.totalorder %s28, 0
      %p215 = por %p213, %p214
      %p216 = scmp.ne.s32.totalorder %s204, %s205
      %p217 = scmp.eq.s32.totalorder %s29, 15
      %p218 = por %p216, %p217
      %p220 = scmp.ne.s32.totalorder %s205, %s219
      %p221 = scmp.eq.s32.totalorder %s29, 0
      %p222 = por %p220, %p221
      %s224 = sadd.s32 %s223, 1
      %p227 = scmp.eq.s32.totalorder %s23, 15
      %p228 = scmp.ne.s32.totalorder %s223, %s225
      %p229 = scmp.eq.s32.totalorder %s23, 0
      %p230 = por %p228, %p229
      %p231 = scmp.ne.s32.totalorder %s223, %s225
      %p232 = scmp.eq.s32.totalorder %s28, 15
      %p233 = por %p231, %p232
      %p234 = scmp.ne.s32.totalorder %s225, %s226
      %p235 = scmp.eq.s32.totalorder %s28, 0
      %p236 = por %p234, %p235
      %p237 = scmp.ne.s32.totalorder %s225, %s226
      %p238 = scmp.eq.s32.totalorder %s29, 15
      %p239 = por %p237, %p238
      %p241 = scmp.ne.s32.totalorder %s226, %s240
      %p242 = scmp.eq.s32.totalorder %s29, 0
      %p243 = por %p241, %p242
      %s245 = sadd.s32 %s244, 1
      %p248 = scmp.eq.s32.totalorder %s23, 15
      %p249 = scmp.ne.s32.totalorder %s244, %s246
      %p250 = scmp.eq.s32.totalorder %s23, 0
      %p251 = por %p249, %p250
      %p252 = scmp.ne.s32.totalorder %s244, %s246
      %p253 = scmp.eq.s32.totalorder %s28, 15
      %p254 = por %p252, %p253
      %p255 = scmp.ne.s32.totalorder %s246, %s247
      %p256 = scmp.eq.s32.totalorder %s28, 0
      %p257 = por %p255, %p256
      %p258 = scmp.ne.s32.totalorder %s246, %s247
      %p259 = scmp.eq.s32.totalorder %s29, 15
      %p260 = por %p258, %p259
      %p262 = scmp.ne.s32.totalorder %s247, %s261
      %p263 = scmp.eq.s32.totalorder %s29, 0
      %p264 = por %p262, %p263
      %s266 = sadd.s32 %s265, 1
      %p269 = scmp.eq.s32.totalorder %s23, 15
      %p270 = scmp.ne.s32.totalorder %s265, %s267
      %p271 = scmp.eq.s32.totalorder %s23, 0
      %p272 = por %p270, %p271
      %p273 = scmp.ne.s32.totalorder %s265, %s267
      %p274 = scmp.eq.s32.totalorder %s28, 15
      %p275 = por %p273, %p274
      %p276 = scmp.ne.s32.totalorder %s267, %s268
      %p277 = scmp.eq.s32.totalorder %s28, 0
      %p278 = por %p276, %p277
      %p279 = scmp.ne.s32.totalorder %s267, %s268
      %p280 = scmp.eq.s32.totalorder %s29, 15
      %p281 = por %p279, %p280
      %p283 = scmp.ne.s32.totalorder %s268, %s282
      %p284 = scmp.eq.s32.totalorder %s29, 0
      %p285 = por %p283, %p284
      %s286 = smul.u32 %s31, %s32
      %s287 = smul.u32 %s45, %s41
      %s288 = ssub.s32 %s30, %s49
      %s289 = ssub.s32 %s286, %s287
      %s290 = sor.u32 %s288, %s289
      %p291 = scmp.eq.s32.totalorder %s290, 0
      %s293 = sadd.s32 %s292, 1
      %s294 = scalar_select %p291, %s292, %s293
      %p297 = pneg %p291
      %p298 = scmp.eq.s32.totalorder %s23, 15
      %p299 = por %p297, %p298
      %p300 = scmp.ne.s32.totalorder %s292, %s295
      %p301 = scmp.eq.s32.totalorder %s23, 0
      %p302 = por %p300, %p301
      %p303 = scmp.ne.s32.totalorder %s292, %s295
      %p304 = scmp.eq.s32.totalorder %s28, 15
      %p305 = por %p303, %p304
      %p306 = scmp.ne.s32.totalorder %s295, %s296
      %p307 = scmp.eq.s32.totalorder %s28, 0
      %p308 = por %p306, %p307
      %p309 = scmp.ne.s32.totalorder %s295, %s296
      %p310 = scmp.eq.s32.totalorder %s29, 15
      %p311 = por %p309, %p310
      %p313 = scmp.ne.s32.totalorder %s296, %s312
      %p314 = scmp.eq.s32.totalorder %s29, 0
      %p315 = por %p313, %p314
      %p316 = scmp.le.s32.totalorder 1, %s23
      %p317 = scmp.lt.s32.totalorder %s23, 17
      %p318 = pnand %p316, %p317
      %p319 = pneg %p318
      // Predicated region
      $region9: #{fast_smooth_se_norm_conv3d.1} parent=5 // pred_check
        _
      $region10: #{fast_smooth_se_norm_conv3d.1} parent=5 // pred_check_branch
        %321 = sbr.rel (%p318) target = $region12
      $region11: #{fast_smooth_se_norm_conv3d.1} parent=5 // pred_region
        %s322 = ssub.s32 %s23, 1
        // Predicated region
        $region13: #{fast_smooth_se_norm_conv3d.1} parent=11 // pred_check
          %p323 = pneg %p89
        $region14: #{fast_smooth_se_norm_conv3d.1} parent=11 // pred_check_branch
          %325 = sbr.rel (%p323) target = $region16
        $region15: #{fast_smooth_se_norm_conv3d.1} parent=11 // pred_region
          %s327 = ssub.s32 128, 128
          %328 = vsyncadd [#allocation7], %s327
          %s330 = sshll.u32 [#allocation6], 4
          %s331 = int_to_ptr.vmem [resolvable:$true] %s330
          %333 = dma.hbm_to_vmem [thread:$0]  %s1, 128, %s331, [#allocation7]
        $region16: #{fast_smooth_se_norm_conv3d.1} parent=11 // pred_fallthru
          _
        // Predicated region
        $region17: #{fast_smooth_se_norm_conv3d.1} parent=11 // pred_check
          %p334 = pneg %p110
        $region18: #{fast_smooth_se_norm_conv3d.1} parent=11 // pred_check_branch
          %336 = sbr.rel (%p334) target = $region20
        $region19: #{fast_smooth_se_norm_conv3d.1} parent=11 // pred_region
          %s338 = ssub.s32 128, 128
          %339 = vsyncadd [#allocation9], %s338
          %s341 = sshll.u32 [#allocation8], 4
          %s342 = int_to_ptr.vmem [resolvable:$true] %s341
          %344 = dma.hbm_to_vmem [thread:$0]  %s2, 128, %s342, [#allocation9]
        $region20: #{fast_smooth_se_norm_conv3d.1} parent=11 // pred_fallthru
          _
        // Predicated region
        $region21: #{fast_smooth_se_norm_conv3d.1} parent=11 // pred_check
          %p345 = pneg %p131
        $region22: #{fast_smooth_se_norm_conv3d.1} parent=11 // pred_check_branch
          %347 = sbr.rel (%p345) target = $region24
        $region23: #{fast_smooth_se_norm_conv3d.1} parent=11 // pred_region
          %s349 = ssub.s32 128, 128
          %350 = vsyncadd [#allocation9], %s349
          %s352 = sshll.u32 [#allocation10], 4
          %s353 = int_to_ptr.vmem [resolvable:$true] %s352
          %355 = dma.hbm_to_vmem [thread:$0]  %s3, 128, %s353, [#allocation9]
        $region24: #{fast_smooth_se_norm_conv3d.1} parent=11 // pred_fallthru
          _
        // Predicated region
        $region25: #{fast_smooth_se_norm_conv3d.1} parent=11 // pred_check
          %p356 = pneg %p152
        $region26: #{fast_smooth_se_norm_conv3d.1} parent=11 // pred_check_branch
          %358 = sbr.rel (%p356) target = $region28
        $region27: #{fast_smooth_se_norm_conv3d.1} parent=11 // pred_region
          %s360 = ssub.s32 16, 16
          %361 = vsyncadd [#allocation12], %s360
          %s363 = sshll.u32 [#allocation11], 4
          %s364 = int_to_ptr.vmem [resolvable:$true] %s363
          %366 = dma.hbm_to_vmem [thread:$0]  %s4, 16, %s364, [#allocation12]
        $region28: #{fast_smooth_se_norm_conv3d.1} parent=11 // pred_fallthru
          _
        // Predicated region
        $region29: #{fast_smooth_se_norm_conv3d.1} parent=11 // pred_check
          %p367 = pneg %p173
        $region30: #{fast_smooth_se_norm_conv3d.1} parent=11 // pred_check_branch
          %369 = sbr.rel (%p367) target = $region32
        $region31: #{fast_smooth_se_norm_conv3d.1} parent=11 // pred_region
          %s371 = ssub.s32 128, 128
          %372 = vsyncadd [#allocation12], %s371
          %s374 = sshll.u32 [#allocation13], 4
          %s375 = int_to_ptr.vmem [resolvable:$true] %s374
          %377 = dma.hbm_to_vmem [thread:$0]  %s5, 128, %s375, [#allocation12]
        $region32: #{fast_smooth_se_norm_conv3d.1} parent=11 // pred_fallthru
          _
        // Predicated region
        $region33: #{fast_smooth_se_norm_conv3d.1} parent=11 // pred_check
          %p378 = pneg %p194
        $region34: #{fast_smooth_se_norm_conv3d.1} parent=11 // pred_check_branch
          %380 = sbr.rel (%p378) target = $region36
        $region35: #{fast_smooth_se_norm_conv3d.1} parent=11 // pred_region
          %s382 = ssub.s32 128, 128
          %383 = vsyncadd [#allocation15], %s382
          %s385 = sshll.u32 [#allocation14], 4
          %s386 = int_to_ptr.vmem [resolvable:$true] %s385
          %388 = dma.hbm_to_vmem [thread:$0]  %s6, 128, %s386, [#allocation15]
        $region36: #{fast_smooth_se_norm_conv3d.1} parent=11 // pred_fallthru
          _
        // Predicated region
        $region37: #{fast_smooth_se_norm_conv3d.1} parent=11 // pred_check
          %p389 = pneg %p215
        $region38: #{fast_smooth_se_norm_conv3d.1} parent=11 // pred_check_branch
          %391 = sbr.rel (%p389) target = $region40
        $region39: #{fast_smooth_se_norm_conv3d.1} parent=11 // pred_region
          %s393 = ssub.s32 128, 128
          %394 = vsyncadd [#allocation15], %s393
          %s396 = sshll.u32 [#allocation16], 4
          %s397 = int_to_ptr.vmem [resolvable:$true] %s396
          %399 = dma.hbm_to_vmem [thread:$0]  %s7, 128, %s397, [#allocation15]
        $region40: #{fast_smooth_se_norm_conv3d.1} parent=11 // pred_fallthru
          _
        // Predicated region
        $region41: #{fast_smooth_se_norm_conv3d.1} parent=11 // pred_check
          %p400 = pneg %p236
        $region42: #{fast_smooth_se_norm_conv3d.1} parent=11 // pred_check_branch
          %402 = sbr.rel (%p400) target = $region44
        $region43: #{fast_smooth_se_norm_conv3d.1} parent=11 // pred_region
          %s404 = ssub.s32 16, 16
          %405 = vsyncadd [#allocation18], %s404
          %s407 = sshll.u32 [#allocation17], 4
          %s408 = int_to_ptr.vmem [resolvable:$true] %s407
          %410 = dma.hbm_to_vmem [thread:$0]  %s8, 16, %s408, [#allocation18]
        $region44: #{fast_smooth_se_norm_conv3d.1} parent=11 // pred_fallthru
          _
        // Predicated region
        $region45: #{fast_smooth_se_norm_conv3d.1} parent=11 // pred_check
          %p411 = pneg %p257
        $region46: #{fast_smooth_se_norm_conv3d.1} parent=11 // pred_check_branch
          %413 = sbr.rel (%p411) target = $region48
        $region47: #{fast_smooth_se_norm_conv3d.1} parent=11 // pred_region
          %s415 = ssub.s32 128, 128
          %416 = vsyncadd [#allocation18], %s415
          %s418 = sshll.u32 [#allocation19], 4
          %s419 = int_to_ptr.vmem [resolvable:$true] %s418
          %421 = dma.hbm_to_vmem [thread:$0]  %s9, 128, %s419, [#allocation18]
        $region48: #{fast_smooth_se_norm_conv3d.1} parent=11 // pred_fallthru
          _
        // Predicated region
        $region49: #{fast_smooth_se_norm_conv3d.1} parent=11 // pred_check
          %p422 = pneg %p278
        $region50: #{fast_smooth_se_norm_conv3d.1} parent=11 // pred_check_branch
          %424 = sbr.rel (%p422) target = $region52
        $region51: #{fast_smooth_se_norm_conv3d.1} parent=11 // pred_region
          %s426 = ssub.s32 128, 128
          %427 = vsyncadd [#allocation21], %s426
          %s429 = sshll.u32 [#allocation20], 4
          %s430 = int_to_ptr.vmem [resolvable:$true] %s429
          %432 = dma.hbm_to_vmem [thread:$0]  %s10, 128, %s430, [#allocation21]
        $region52: #{fast_smooth_se_norm_conv3d.1} parent=11 // pred_fallthru
          _
      $region12: #{fast_smooth_se_norm_conv3d.1} parent=5 // pred_fallthru
        _
      %p433 = scmp.lt.s32.totalorder %s23, 16
      // Predicated region
      $region53: #{fast_smooth_se_norm_conv3d.1} parent=5 // pred_check
        %p434 = pneg %p433
      $region54: #{fast_smooth_se_norm_conv3d.1} parent=5 // pred_check_branch
        %436 = sbr.rel (%p434) target = $region56
      $region55: #{fast_smooth_se_norm_conv3d.1} parent=5 // pred_region
        // Predicated region
        $region57: #{fast_smooth_se_norm_conv3d.1} parent=55 // pred_check
          %p437 = pneg %p62
        $region58: #{fast_smooth_se_norm_conv3d.1} parent=55 // pred_check_branch
          %439 = sbr.rel (%p437) target = $region60
        $region59: #{fast_smooth_se_norm_conv3d.1} parent=55 // pred_region
          %p440 = scmp.lt.s32.totalorder %s30, 1
          %s441 = scalar_select %p440, %s30, 1
          %s442 = smul.addr %s441, 32
          %s443 = smul.addr %s442, 4
          %s444 = scalar_lea.vmem %s0, %s443
        $region60: #{fast_smooth_se_norm_conv3d.1} parent=55 // pred_fallthru
          _
      $region56: #{fast_smooth_se_norm_conv3d.1} parent=5 // pred_fallthru
        _
      %p445 = scmp.le.s32.totalorder 1, %s23
      %p446 = scmp.lt.s32.totalorder %s23, 17
      %p447 = pnand %p445, %p446
      %p448 = pneg %p447
      // Predicated region
      $region61: #{fast_smooth_se_norm_conv3d.1} parent=5 // pred_check
        _
      $region62: #{fast_smooth_se_norm_conv3d.1} parent=5 // pred_check_branch
        %450 = sbr.rel (%p447) target = $region64
      $region63: #{fast_smooth_se_norm_conv3d.1} parent=5 // pred_region
        %s451 = ssub.s32 %s23, 1
        // Predicated region
        $region65: #{fast_smooth_se_norm_conv3d.1} parent=63 // pred_check
          %p452 = pneg %p89
        $region66: #{fast_smooth_se_norm_conv3d.1} parent=63 // pred_check_branch
          %454 = sbr.rel (%p452) target = $region68
        $region67: #{fast_smooth_se_norm_conv3d.1} parent=63 // pred_region
          %455 = dma.done [#allocation7], 128
        $region68: #{fast_smooth_se_norm_conv3d.1} parent=63 // pred_fallthru
          _
        // Predicated region
        $region69: #{fast_smooth_se_norm_conv3d.1} parent=63 // pred_check
          %p456 = pneg %p110
        $region70: #{fast_smooth_se_norm_conv3d.1} parent=63 // pred_check_branch
          %458 = sbr.rel (%p456) target = $region72
        $region71: #{fast_smooth_se_norm_conv3d.1} parent=63 // pred_region
          %459 = dma.done [#allocation9], 128
        $region72: #{fast_smooth_se_norm_conv3d.1} parent=63 // pred_fallthru
          _
        // Predicated region
        $region73: #{fast_smooth_se_norm_conv3d.1} parent=63 // pred_check
          %p460 = pneg %p131
        $region74: #{fast_smooth_se_norm_conv3d.1} parent=63 // pred_check_branch
          %462 = sbr.rel (%p460) target = $region76
        $region75: #{fast_smooth_se_norm_conv3d.1} parent=63 // pred_region
          %463 = dma.done [#allocation9], 128
        $region76: #{fast_smooth_se_norm_conv3d.1} parent=63 // pred_fallthru
          _
        // Predicated region
        $region77: #{fast_smooth_se_norm_conv3d.1} parent=63 // pred_check
          %p464 = pneg %p152
        $region78: #{fast_smooth_se_norm_conv3d.1} parent=63 // pred_check_branch
          %466 = sbr.rel (%p464) target = $region80
        $region79: #{fast_smooth_se_norm_conv3d.1} parent=63 // pred_region
          %467 = dma.done [#allocation12], 16
        $region80: #{fast_smooth_se_norm_conv3d.1} parent=63 // pred_fallthru
          _
        // Predicated region
        $region81: #{fast_smooth_se_norm_conv3d.1} parent=63 // pred_check
          %p468 = pneg %p173
        $region82: #{fast_smooth_se_norm_conv3d.1} parent=63 // pred_check_branch
          %470 = sbr.rel (%p468) target = $region84
        $region83: #{fast_smooth_se_norm_conv3d.1} parent=63 // pred_region
          %471 = dma.done [#allocation12], 128
        $region84: #{fast_smooth_se_norm_conv3d.1} parent=63 // pred_fallthru
          _
        // Predicated region
        $region85: #{fast_smooth_se_norm_conv3d.1} parent=63 // pred_check
          %p472 = pneg %p194
        $region86: #{fast_smooth_se_norm_conv3d.1} parent=63 // pred_check_branch
          %474 = sbr.rel (%p472) target = $region88
        $region87: #{fast_smooth_se_norm_conv3d.1} parent=63 // pred_region
          %475 = dma.done [#allocation15], 128
        $region88: #{fast_smooth_se_norm_conv3d.1} parent=63 // pred_fallthru
          _
        // Predicated region
        $region89: #{fast_smooth_se_norm_conv3d.1} parent=63 // pred_check
          %p476 = pneg %p215
        $region90: #{fast_smooth_se_norm_conv3d.1} parent=63 // pred_check_branch
          %478 = sbr.rel (%p476) target = $region92
        $region91: #{fast_smooth_se_norm_conv3d.1} parent=63 // pred_region
          %479 = dma.done [#allocation15], 128
        $region92: #{fast_smooth_se_norm_conv3d.1} parent=63 // pred_fallthru
          _
        // Predicated region
        $region93: #{fast_smooth_se_norm_conv3d.1} parent=63 // pred_check
          %p480 = pneg %p236
        $region94: #{fast_smooth_se_norm_conv3d.1} parent=63 // pred_check_branch
          %482 = sbr.rel (%p480) target = $region96
        $region95: #{fast_smooth_se_norm_conv3d.1} parent=63 // pred_region
          %483 = dma.done [#allocation18], 16
        $region96: #{fast_smooth_se_norm_conv3d.1} parent=63 // pred_fallthru
          _
        // Predicated region
        $region97: #{fast_smooth_se_norm_conv3d.1} parent=63 // pred_check
          %p484 = pneg %p257
        $region98: #{fast_smooth_se_norm_conv3d.1} parent=63 // pred_check_branch
          %486 = sbr.rel (%p484) target = $region100
        $region99: #{fast_smooth_se_norm_conv3d.1} parent=63 // pred_region
          %487 = dma.done [#allocation18], 128
        $region100: #{fast_smooth_se_norm_conv3d.1} parent=63 // pred_fallthru
          _
        // Predicated region
        $region101: #{fast_smooth_se_norm_conv3d.1} parent=63 // pred_check
          %p488 = pneg %p278
        $region102: #{fast_smooth_se_norm_conv3d.1} parent=63 // pred_check_branch
          %490 = sbr.rel (%p488) target = $region104
        $region103: #{fast_smooth_se_norm_conv3d.1} parent=63 // pred_region
          %491 = dma.done [#allocation21], 128
        $region104: #{fast_smooth_se_norm_conv3d.1} parent=63 // pred_fallthru
          _
        %p492 = scmp.lt.s32.totalorder %s33, 1
        %s493 = scalar_select %p492, %s33, 1
        %s494 = smul.addr %s493, 32
        %s495 = smul.addr %s494, 4
        %s496 = scalar_lea.vmem %s0, %s495
        %p497 = pneg %p68
        %p498 = pneg %p65
        %p499 = pneg %p89
        %p500 = pneg %p86
        %p501 = pneg %p110
        %p502 = pneg %p107
        %p503 = pneg %p131
        %p504 = pneg %p128
        %p505 = pneg %p152
        %p506 = pneg %p149
        %p507 = pneg %p173
        %p508 = pneg %p170
        %p509 = pneg %p194
        %p510 = pneg %p191
        %p511 = pneg %p215
        %p512 = pneg %p212
        %p513 = pneg %p236
        %p514 = pneg %p233
        %p515 = pneg %p257
        %p516 = pneg %p254
        %p517 = pneg %p278
        %p518 = pneg %p275
        %p519 = pneg %p308
        %p520 = pneg %p305
        %s521 = smul.u32 %s34, %s35
        %s522 = smul.u32 8, %s521
        %p523 = scmp.lt.s32.totalorder %s33, 1
        %s524 = scalar_select %p523, %s33, 1
        %p525 = scmp.lt.s32.totalorder %s522, 31
        %s526 = scalar_select %p525, %s522, 31
        %s527 = smul.addr %s524, 32
        %s528 = sadd.s32 %s526, %s527
        %s529 = smul.addr %s528, 8
        %s530 = scalar_lea.vmem %s11, %s529
        %p531 = scmp.lt.s32.totalorder %s33, 1
        %s532 = scalar_select %p531, %s33, 1
        %s533 = smul.addr %s532, 32
        %s534 = smul.addr %s533, 4
        %s535 = scalar_lea.vmem %s0, %s534
        %s536 = smul.u32 %s34, %s35
        %s537 = smul.u32 8, %s536
        %p538 = scmp.lt.s32.totalorder %s33, 1
        %s539 = scalar_select %p538, %s33, 1
        %p540 = scmp.lt.s32.totalorder %s537, 31
        %s541 = scalar_select %p540, %s537, 31
        %s542 = smul.addr %s539, 32
        %s543 = sadd.s32 %s541, %s542
        %s544 = smul.addr %s543, 8
        %s545 = scalar_lea.vmem %s11, %s544
        %s546 = smul.u32 %s34, %s35
        %s547 = smul.u32 8, %s546
        %p548 = scmp.eq.s32.totalorder %s34, 0
        %p549 = scmp.eq.s32.totalorder %s35, 0
        %p550 = pnand %p548, %p549
        %p551 = pneg %p550
        // Predicated region
        $region105: #{fast_smooth_se_norm_conv3d.1} parent=63 // pred_check
          _
        $region106: #{fast_smooth_se_norm_conv3d.1} parent=63 // pred_check_branch
          %553 = sbr.rel (%p550) target = $region108
        $region107: #{fast_smooth_se_norm_conv3d.1} parent=63 // pred_region
          %vm554 = vcmask 7168
          %555 = vst.msk [vmem:[#allocation2] sm:$0xff] %vm554, 0.0
          %556 = vst.msk [vmem:[#allocation3] sm:$0xff] %vm554, 0.0
        $region108: #{fast_smooth_se_norm_conv3d.1} parent=63 // pred_fallthru
          _
        // Predicated region
        $region109: #{fast_smooth_se_norm_conv3d.1} parent=63 // pred_check
          %p557 = pneg %p548
        $region110: #{fast_smooth_se_norm_conv3d.1} parent=63 // pred_check_branch
          %559 = sbr.rel (%p557) target = $region112
        $region111: #{fast_smooth_se_norm_conv3d.1} parent=63 // pred_region
          %s560 = smul.u32 %s35, 1024
          %s561 = sshra.s32 %s560, 7
          %s562 = sand.u32 %s560, 127
          %s563 = smul.addr %s561, 4
          %s564 = scalar_lea.vmem %s535, %s563
          %v565 = vld [vmem:[%s564] sm:$0xff]
          %v566 = vld [vmem:[%s564 + $0x8] sm:$0xff]
          %v567 = vld [vmem:[%s564 + $0x10] sm:$0xff]
          %v568 = vld [vmem:[%s564 + $0x18] sm:$0xff]
          %v569 = vld [vmem:[#allocation6] sm:$0xff]
          %v570 = vld [vmem:[#allocation8] sm:$0xff]
          %572 = vset.pattern.permute.xlu0 0
          %573 = vperm.xlu0 %572, %v570
          %v574 = vpop.permute.xlu0 %573
          %v580 = vcombine.high %v565, %v565
          %v581 = vcombine.high %v566, %v566
          %v582 = vcombine.high %v567, %v567
          %v583 = vcombine.high %v568, %v568
          %vm584 = vcmask 31744
          %v586 = vsel %vm584, %v569, 0
          %vm588 = vcmask 1043456
          %v589 = vsel %vm588, %v565, 0
          %v591 = vsel %vm588, %v580, 0
          %v593 = vsel %vm588, %v566, 0
          %v595 = vsel %vm588, %v581, 0
          %v597 = vsel %vm588, %v567, 0
          %v599 = vsel %vm588, %v582, 0
          %v601 = vsel %vm588, %v568, 0
          %v603 = vsel %vm588, %v583, 0
          %605 = vmatprep.subr.mxu0 %v591
          %606 = vmatpush1.msra.mxu0 %v589
          %607 = vmatprep.subr.mxu0 0.0
          %608 = vmatpush1.msra.mxu0 0.0
          %609 = vmatprep.subr.mxu0 0.0
          %610 = vmatpush1.msra.mxu0 0.0
          %611 = vmatprep.subr.mxu0 0.0
          %612 = vmatpush1.msra.mxu0 0.0
          %613 = vmatprep.subr.mxu0 0.0
          %614 = vmatpush1.msra.mxu0 0.0
          %615 = vmatprep.subr.mxu0 0.0
          %616 = vmatpush1.msra.mxu0 0.0
          %617 = vmatprep.subr.mxu0 0.0
          %618 = vmatpush1.msra.mxu0 0.0
          %619 = vmatprep.subr.mxu0 0.0
          %620 = vmatpush1.msra.mxu0 0.0
          %621 = vmatprep.subr.mxu0 0.0
          %622 = vmatpush1.msra.mxu0 0.0
          %623 = vmatprep.subr.mxu0 0.0
          %624 = vmatpush1.msra.mxu0 0.0
          %625 = vmatprep.subr.mxu0 0.0
          %626 = vmatpush1.msra.mxu0 0.0
          %627 = vmatprep.subr.mxu0 0.0
          %628 = vmatpush1.msra.mxu0 0.0
          %629 = vmatprep.subr.mxu0 0.0
          %630 = vmatpush1.msra.mxu0 0.0
          %631 = vmatprep.subr.mxu0 0.0
          %632 = vmatpush1.msra.mxu0 0.0
          %633 = vmatprep.subr.mxu0 0.0
          %634 = vmatpush1.msra.mxu0 0.0
          %635 = vmatprep.subr.mxu0 0.0
          %636 = vmatpush1.msra.mxu0 0.0
          %637 = vmatprep.subr.mxu0 0.0
          %638 = vmatpush1.msra.mxu0 0.0
          %639 = vmatprep.subr.mxu0 0.0
          %640 = vmatpush1.msra.mxu0 0.0
          %641 = vmatprep.subr.mxu0 0.0
          %642 = vmatpush1.msra.mxu0 0.0
          %643 = vmatprep.subr.mxu0 0.0
          %644 = vmatpush1.msra.mxu0 0.0
          %645 = vmatprep.subr.mxu0 0.0
          %646 = vmatpush1.msra.mxu0 0.0
          %647 = vmatprep.subr.mxu0 0.0
          %648 = vmatpush1.msra.mxu0 0.0
          %649 = vmatprep.subr.mxu0 0.0
          %650 = vmatpush1.msra.mxu0 0.0
          %651 = vmatprep.subr.mxu0 0.0
          %652 = vmatpush1.msra.mxu0 0.0
          %653 = vmatprep.subr.mxu0 0.0
          %654 = vmatpush1.msra.mxu0 0.0
          %655 = vmatprep.subr.mxu0 0.0
          %656 = vmatpush1.msra.mxu0 0.0
          %657 = vmatprep.subr.mxu0 0.0
          %658 = vmatpush1.msra.mxu0 0.0
          %659 = vmatprep.subr.mxu0 0.0
          %660 = vmatpush1.msra.mxu0 0.0
          %661 = vmatprep.subr.mxu0 0.0
          %662 = vmatpush1.msra.mxu0 0.0
          %663 = vmatprep.subr.mxu0 0.0
          %664 = vmatpush1.msra.mxu0 0.0
          %665 = vmatprep.subr.mxu0 0.0
          %666 = vmatpush1.msra.mxu0 0.0
          %667 = vmatprep.subr.mxu0 0.0
          %668 = vmatpush1.msra.mxu0 0.0
          %669 = vmatprep.mubr.f32.mxu0 0.0
          %670 = vmatmul.mubr.f32.gmra.mrb[0].mxu0 %v586
          %v671 = vpop.f32.mrb[0].mxu0
          %v672 = vadd.f32 %v574, %v671
          %v673 = vpop.f32.mrb[0].mxu0
          %v674 = vadd.f32 %v574, %v673
          %675 = vdwg.mxu0
          %676 = vmatprep.subr.mxu0 %v595
          %677 = vmatpush1.msra.mxu0 %v593
          %678 = vmatprep.subr.mxu0 0.0
          %679 = vmatpush1.msra.mxu0 0.0
          %680 = vmatprep.subr.mxu0 0.0
          %681 = vmatpush1.msra.mxu0 0.0
          %682 = vmatprep.subr.mxu0 0.0
          %683 = vmatpush1.msra.mxu0 0.0
          %684 = vmatprep.subr.mxu0 0.0
          %685 = vmatpush1.msra.mxu0 0.0
          %686 = vmatprep.subr.mxu0 0.0
          %687 = vmatpush1.msra.mxu0 0.0
          %688 = vmatprep.subr.mxu0 0.0
          %689 = vmatpush1.msra.mxu0 0.0
          %690 = vmatprep.subr.mxu0 0.0
          %691 = vmatpush1.msra.mxu0 0.0
          %692 = vmatprep.subr.mxu0 0.0
          %693 = vmatpush1.msra.mxu0 0.0
          %694 = vmatprep.subr.mxu0 0.0
          %695 = vmatpush1.msra.mxu0 0.0
          %696 = vmatprep.subr.mxu0 0.0
          %697 = vmatpush1.msra.mxu0 0.0
          %698 = vmatprep.subr.mxu0 0.0
          %699 = vmatpush1.msra.mxu0 0.0
          %700 = vmatprep.subr.mxu0 0.0
          %701 = vmatpush1.msra.mxu0 0.0
          %702 = vmatprep.subr.mxu0 0.0
          %703 = vmatpush1.msra.mxu0 0.0
          %704 = vmatprep.subr.mxu0 0.0
          %705 = vmatpush1.msra.mxu0 0.0
          %706 = vmatprep.subr.mxu0 0.0
          %707 = vmatpush1.msra.mxu0 0.0
          %708 = vmatprep.subr.mxu0 0.0
          %709 = vmatpush1.msra.mxu0 0.0
          %710 = vmatprep.subr.mxu0 0.0
          %711 = vmatpush1.msra.mxu0 0.0
          %712 = vmatprep.subr.mxu0 0.0
          %713 = vmatpush1.msra.mxu0 0.0
          %714 = vmatprep.subr.mxu0 0.0
          %715 = vmatpush1.msra.mxu0 0.0
          %716 = vmatprep.subr.mxu0 0.0
          %717 = vmatpush1.msra.mxu0 0.0
          %718 = vmatprep.subr.mxu0 0.0
          %719 = vmatpush1.msra.mxu0 0.0
          %720 = vmatprep.subr.mxu0 0.0
          %721 = vmatpush1.msra.mxu0 0.0
          %722 = vmatprep.subr.mxu0 0.0
          %723 = vmatpush1.msra.mxu0 0.0
          %724 = vmatprep.subr.mxu0 0.0
          %725 = vmatpush1.msra.mxu0 0.0
          %726 = vmatprep.subr.mxu0 0.0
          %727 = vmatpush1.msra.mxu0 0.0
          %728 = vmatprep.subr.mxu0 0.0
          %729 = vmatpush1.msra.mxu0 0.0
          %730 = vmatprep.subr.mxu0 0.0
          %731 = vmatpush1.msra.mxu0 0.0
          %732 = vmatprep.subr.mxu0 0.0
          %733 = vmatpush1.msra.mxu0 0.0
          %734 = vmatprep.subr.mxu0 0.0
          %735 = vmatpush1.msra.mxu0 0.0
          %736 = vmatprep.subr.mxu0 0.0
          %737 = vmatpush1.msra.mxu0 0.0
          %738 = vmatprep.subr.mxu0 0.0
          %739 = vmatpush1.msra.mxu0 0.0
          %740 = vmatprep.mubr.f32.mxu0 0.0
          %741 = vmatmul.mubr.f32.gmra.mrb[0].mxu0 %v586
          %v742 = vpop.f32.mrb[0].mxu0
          %v743 = vadd.f32 %v574, %v742
          %v744 = vpop.f32.mrb[0].mxu0
          %v745 = vadd.f32 %v574, %v744
          %746 = vdwg.mxu0
          %747 = vmatprep.subr.mxu0 %v599
          %748 = vmatpush1.msra.mxu0 %v597
          %749 = vmatprep.subr.mxu0 0.0
          %750 = vmatpush1.msra.mxu0 0.0
          %751 = vmatprep.subr.mxu0 0.0
          %752 = vmatpush1.msra.mxu0 0.0
          %753 = vmatprep.subr.mxu0 0.0
          %754 = vmatpush1.msra.mxu0 0.0
          %755 = vmatprep.subr.mxu0 0.0
          %756 = vmatpush1.msra.mxu0 0.0
          %757 = vmatprep.subr.mxu0 0.0
          %758 = vmatpush1.msra.mxu0 0.0
          %759 = vmatprep.subr.mxu0 0.0
          %760 = vmatpush1.msra.mxu0 0.0
          %761 = vmatprep.subr.mxu0 0.0
          %762 = vmatpush1.msra.mxu0 0.0
          %763 = vmatprep.subr.mxu0 0.0
          %764 = vmatpush1.msra.mxu0 0.0
          %765 = vmatprep.subr.mxu0 0.0
          %766 = vmatpush1.msra.mxu0 0.0
          %767 = vmatprep.subr.mxu0 0.0
          %768 = vmatpush1.msra.mxu0 0.0
          %769 = vmatprep.subr.mxu0 0.0
          %770 = vmatpush1.msra.mxu0 0.0
          %771 = vmatprep.subr.mxu0 0.0
          %772 = vmatpush1.msra.mxu0 0.0
          %773 = vmatprep.subr.mxu0 0.0
          %774 = vmatpush1.msra.mxu0 0.0
          %775 = vmatprep.subr.mxu0 0.0
          %776 = vmatpush1.msra.mxu0 0.0
          %777 = vmatprep.subr.mxu0 0.0
          %778 = vmatpush1.msra.mxu0 0.0
          %779 = vmatprep.subr.mxu0 0.0
          %780 = vmatpush1.msra.mxu0 0.0
          %781 = vmatprep.subr.mxu0 0.0
          %782 = vmatpush1.msra.mxu0 0.0
          %783 = vmatprep.subr.mxu0 0.0
          %784 = vmatpush1.msra.mxu0 0.0
          %785 = vmatprep.subr.mxu0 0.0
          %786 = vmatpush1.msra.mxu0 0.0
          %787 = vmatprep.subr.mxu0 0.0
          %788 = vmatpush1.msra.mxu0 0.0
          %789 = vmatprep.subr.mxu0 0.0
          %790 = vmatpush1.msra.mxu0 0.0
          %791 = vmatprep.subr.mxu0 0.0
          %792 = vmatpush1.msra.mxu0 0.0
          %793 = vmatprep.subr.mxu0 0.0
          %794 = vmatpush1.msra.mxu0 0.0
          %795 = vmatprep.subr.mxu0 0.0
          %796 = vmatpush1.msra.mxu0 0.0
          %797 = vmatprep.subr.mxu0 0.0
          %798 = vmatpush1.msra.mxu0 0.0
          %799 = vmatprep.subr.mxu0 0.0
          %800 = vmatpush1.msra.mxu0 0.0
          %801 = vmatprep.subr.mxu0 0.0
          %802 = vmatpush1.msra.mxu0 0.0
          %803 = vmatprep.subr.mxu0 0.0
          %804 = vmatpush1.msra.mxu0 0.0
          %805 = vmatprep.subr.mxu0 0.0
          %806 = vmatpush1.msra.mxu0 0.0
          %807 = vmatprep.subr.mxu0 0.0
          %808 = vmatpush1.msra.mxu0 0.0
          %809 = vmatprep.subr.mxu0 0.0
          %810 = vmatpush1.msra.mxu0 0.0
          %811 = vmatprep.mubr.f32.mxu0 0.0
          %812 = vmatmul.mubr.f32.gmra.mrb[0].mxu0 %v586
          %v813 = vpop.f32.mrb[0].mxu0
          %v814 = vadd.f32 %v574, %v813
          %v815 = vpop.f32.mrb[0].mxu0
          %v816 = vadd.f32 %v574, %v815
          %817 = vdwg.mxu0
          %818 = vmatprep.subr.mxu0 %v603
          %819 = vmatpush1.msra.mxu0 %v601
          %820 = vmatprep.subr.mxu0 0.0
          %821 = vmatpush1.msra.mxu0 0.0
          %822 = vmatprep.subr.mxu0 0.0
          %823 = vmatpush1.msra.mxu0 0.0
          %824 = vmatprep.subr.mxu0 0.0
          %825 = vmatpush1.msra.mxu0 0.0
          %826 = vmatprep.subr.mxu0 0.0
          %827 = vmatpush1.msra.mxu0 0.0
          %828 = vmatprep.subr.mxu0 0.0
          %829 = vmatpush1.msra.mxu0 0.0
          %830 = vmatprep.subr.mxu0 0.0
          %831 = vmatpush1.msra.mxu0 0.0
          %832 = vmatprep.subr.mxu0 0.0
          %833 = vmatpush1.msra.mxu0 0.0
          %834 = vmatprep.subr.mxu0 0.0
          %835 = vmatpush1.msra.mxu0 0.0
          %836 = vmatprep.subr.mxu0 0.0
          %837 = vmatpush1.msra.mxu0 0.0
          %838 = vmatprep.subr.mxu0 0.0
          %839 = vmatpush1.msra.mxu0 0.0
          %840 = vmatprep.subr.mxu0 0.0
          %841 = vmatpush1.msra.mxu0 0.0
          %842 = vmatprep.subr.mxu0 0.0
          %843 = vmatpush1.msra.mxu0 0.0
          %844 = vmatprep.subr.mxu0 0.0
          %845 = vmatpush1.msra.mxu0 0.0
          %846 = vmatprep.subr.mxu0 0.0
          %847 = vmatpush1.msra.mxu0 0.0
          %848 = vmatprep.subr.mxu0 0.0
          %849 = vmatpush1.msra.mxu0 0.0
          %850 = vmatprep.subr.mxu0 0.0
          %851 = vmatpush1.msra.mxu0 0.0
          %852 = vmatprep.subr.mxu0 0.0
          %853 = vmatpush1.msra.mxu0 0.0
          %854 = vmatprep.subr.mxu0 0.0
          %855 = vmatpush1.msra.mxu0 0.0
          %856 = vmatprep.subr.mxu0 0.0
          %857 = vmatpush1.msra.mxu0 0.0
          %858 = vmatprep.subr.mxu0 0.0
          %859 = vmatpush1.msra.mxu0 0.0
          %860 = vmatprep.subr.mxu0 0.0
          %861 = vmatpush1.msra.mxu0 0.0
          %862 = vmatprep.subr.mxu0 0.0
          %863 = vmatpush1.msra.mxu0 0.0
          %864 = vmatprep.subr.mxu0 0.0
          %865 = vmatpush1.msra.mxu0 0.0
          %866 = vmatprep.subr.mxu0 0.0
          %867 = vmatpush1.msra.mxu0 0.0
          %868 = vmatprep.subr.mxu0 0.0
          %869 = vmatpush1.msra.mxu0 0.0
          %870 = vmatprep.subr.mxu0 0.0
          %871 = vmatpush1.msra.mxu0 0.0
          %872 = vmatprep.subr.mxu0 0.0
          %873 = vmatpush1.msra.mxu0 0.0
          %874 = vmatprep.subr.mxu0 0.0
          %875 = vmatpush1.msra.mxu0 0.0
          %876 = vmatprep.subr.mxu0 0.0
          %877 = vmatpush1.msra.mxu0 0.0
          %878 = vmatprep.subr.mxu0 0.0
          %879 = vmatpush1.msra.mxu0 0.0
          %880 = vmatprep.subr.mxu0 0.0
          %881 = vmatpush1.msra.mxu0 0.0
          %882 = vmatprep.mubr.f32.mxu0 0.0
          %883 = vmatmul.mubr.f32.gmra.mrb[0].mxu0 %v586
          %v884 = vpop.f32.mrb[0].mxu0
          %v885 = vadd.f32 %v574, %v884
          %v886 = vpop.f32.mrb[0].mxu0
          %v887 = vadd.f32 %v574, %v886
          %888 = vdwg.mxu0
          %v889 = vmax.f32 %v672, 0.0
          %v890 = vmax.f32 %v674, 0.0
          %v891 = vmax.f32 %v743, 0.0
          %v892 = vmax.f32 %v745, 0.0
          %v893 = vmax.f32 %v814, 0.0
          %v894 = vmax.f32 %v816, 0.0
          %v895 = vmax.f32 %v885, 0.0
          %v896 = vmax.f32 %v887, 0.0
          %v897 = vld [vmem:[#allocation2] sm:$0xff]
          %v898 = vadd.f32 %v889, %v890
          %v899 = vadd.f32 %v898, %v891
          %v900 = vadd.f32 %v899, %v892
          %v901 = vadd.f32 %v900, %v893
          %v902 = vadd.f32 %v901, %v894
          %v903 = vadd.f32 %v902, %v895
          %v904 = vadd.f32 %v903, %v896
          %905 = vadd.xlane.f32.xlu0 %v904
          %v906 = vpop.xlane.xlu0 %905
          %v907 = vadd.f32 %v897, %v906
          %vm908 = vcmask 7168
          %909 = vst.msk [vmem:[#allocation2] sm:$0xff] %vm908, %v907
          %v910 = vld [vmem:[#allocation3] sm:$0xff]
          %v911 = vmul.f32 %v889, %v889
          %v912 = vmul.f32 %v890, %v890
          %v913 = vmul.f32 %v891, %v891
          %v914 = vmul.f32 %v892, %v892
          %v915 = vmul.f32 %v893, %v893
          %v916 = vmul.f32 %v894, %v894
          %v917 = vmul.f32 %v895, %v895
          %v918 = vmul.f32 %v896, %v896
          %v919 = vadd.f32 %v911, %v912
          %v920 = vadd.f32 %v919, %v913
          %v921 = vadd.f32 %v920, %v914
          %v922 = vadd.f32 %v921, %v915
          %v923 = vadd.f32 %v922, %v916
          %v924 = vadd.f32 %v923, %v917
          %v925 = vadd.f32 %v924, %v918
          %926 = vadd.xlane.f32.xlu0 %v925
          %v927 = vpop.xlane.xlu0 %926
          %v928 = vadd.f32 %v910, %v927
          %929 = vst.msk [vmem:[#allocation3] sm:$0xff] %vm908, %v928
        $region112: #{fast_smooth_se_norm_conv3d.1} parent=63 // pred_fallthru
          _
        %p930 = scmp.eq.s32.totalorder %s35, 3
        %p931 = pnand %p548, %p930
        %p932 = pneg %p931
        // Predicated region
        $region113: #{fast_smooth_se_norm_conv3d.1} parent=63 // pred_check
          _
        $region114: #{fast_smooth_se_norm_conv3d.1} parent=63 // pred_check_branch
          %934 = sbr.rel (%p931) target = $region116
        $region115: #{fast_smooth_se_norm_conv3d.1} parent=63 // pred_region
          %v935 = vld [vmem:[#allocation2] sm:$0xff]
          %v936 = vmul.f32 %v935, 0.00024414063
          %v937 = vld [vmem:[#allocation3] sm:$0xff]
          %v938 = vmul.f32 %v937, 0.00024414063
          %v939 = vmul.f32 %v936, %v936
          %v940 = vsub.f32 %v938, %v939
          %v941 = vmax.f32 %v940, 0.0
          %v942 = vld [vmem:[#allocation10] sm:$0xff]
          %944 = vset.pattern.permute.xlu0 0
          %945 = vperm.xlu0 %944, %v936
          %v946 = vpop.permute.xlu0 %945
          %v948 = vmul.f32 %v942, %v946
          %vm949 = vcmask 31744
          %v950 = vsel %vm949, %v948, 0.0
          %v951 = vrot.slane %v950, 4
          %v952 = vadd.f32 %v950, %v951
          %v953 = vrot.slane %v952, 2
          %v954 = vadd.f32 %v952, %v953
          %v955 = vrot.slane %v954, 1
          %v956 = vadd.f32 %v954, %v955
          %v957 = vld [vmem:[#allocation11] sm:$0x1]
          %v958 = vadd.f32 %v956, %v957
          %v959 = vmax.f32 %v958, 0.0
          %v960 = vld [vmem:[#allocation13] sm:$0xff]
          %v961 = vlaneseq
          %v962 = vshrl.u32 %v961, 7
          %v963 = vsub.s32 0, %v962
          %v964 = vrot.slane %v959, %v963
          %v965 = vmul.f32 %v960, %v964
          %v966 = vsel %vm949, %v965, 0.0
          %967 = vadd.xlane.f32.xlu0 %v966
          %v968 = vpop.xlane.xlu0 %967
          %v969 = vld [vmem:[#allocation14] sm:$0xff]
          %v970 = vadd.f32 %v968, %v969
          %v971 = vxor.u32 %v970, 2147483648
          %v972 = vmul.f32 %v971, 1.442695
          %v973 = vpow.pop %v972
          %v974 = vadd.f32 %v973, 1.0
          %v975 = vrcp.pop %v974
          %v976 = vmul.f32 1.0, %v975
          %v977 = vld [vmem:[#allocation16] sm:$0xff]
          %v978 = vmul.f32 %v977, %v946
          %v979 = vsel %vm949, %v978, 0.0
          %v980 = vrot.slane %v979, 4
          %v981 = vadd.f32 %v979, %v980
          %v982 = vrot.slane %v981, 2
          %v983 = vadd.f32 %v981, %v982
          %v984 = vrot.slane %v983, 1
          %v985 = vadd.f32 %v983, %v984
          %v986 = vld [vmem:[#allocation17] sm:$0x1]
          %v987 = vadd.f32 %v985, %v986
          %v988 = vmax.f32 %v987, 0.0
          %v989 = vld [vmem:[#allocation19] sm:$0xff]
          %v990 = vlaneseq
          %v991 = vshrl.u32 %v990, 7
          %v992 = vsub.s32 0, %v991
          %v993 = vrot.slane %v988, %v992
          %v994 = vmul.f32 %v989, %v993
          %v995 = vsel %vm949, %v994, 0.0
          %996 = vadd.xlane.f32.xlu0 %v995
          %v997 = vpop.xlane.xlu0 %996
          %v998 = vld [vmem:[#allocation20] sm:$0xff]
          %v999 = vadd.f32 %v997, %v998
          %v1000 = vtanh.pop %v999
          %v1001 = vadd.f32 %v941, 1e-05
          %v1002 = vrsqrt.pop %v1001
          %v1003 = vmul.f32 %v976, %v1002
          %vm1004 = vcmask 7168
          %1005 = vst.msk [vmem:[#allocation4] sm:$0xff] %vm1004, %v1003
          %v1006 = vmul.f32 %v976, %v936
          %v1007 = vmul.f32 %v1006, %v1002
          %v1008 = vsub.f32 %v1000, %v1007
          %1009 = vst.msk [vmem:[#allocation5] sm:$0xff] %vm1004, %v1008
        $region116: #{fast_smooth_se_norm_conv3d.1} parent=63 // pred_fallthru
          _
        %p1010 = scmp.eq.s32.totalorder %s34, 1
        // Predicated region
        $region117: #{fast_smooth_se_norm_conv3d.1} parent=63 // pred_check
          %p1011 = pneg %p1010
        $region118: #{fast_smooth_se_norm_conv3d.1} parent=63 // pred_check_branch
          %1013 = sbr.rel (%p1011) target = $region120
        $region119: #{fast_smooth_se_norm_conv3d.1} parent=63 // pred_region
          %s1014 = smul.u32 %s35, 1024
          %s1015 = sshra.s32 %s1014, 7
          %s1016 = sand.u32 %s1014, 127
          %s1017 = smul.addr %s1015, 4
          %s1018 = scalar_lea.vmem %s535, %s1017
          %v1019 = vld [vmem:[%s1018] sm:$0xff]
          %v1020 = vld [vmem:[%s1018 + $0x8] sm:$0xff]
          %v1021 = vld [vmem:[%s1018 + $0x10] sm:$0xff]
          %v1022 = vld [vmem:[%s1018 + $0x18] sm:$0xff]
          %v1023 = vld [vmem:[#allocation6] sm:$0xff]
          %v1024 = vld [vmem:[#allocation8] sm:$0xff]
          %1026 = vset.pattern.permute.xlu0 0
          %1027 = vperm.xlu0 %1026, %v1024
          %v1028 = vpop.permute.xlu0 %1027
          %v1034 = vcombine.high %v1019, %v1019
          %v1035 = vcombine.high %v1020, %v1020
          %v1036 = vcombine.high %v1021, %v1021
          %v1037 = vcombine.high %v1022, %v1022
          %vm1038 = vcmask 31744
          %v1040 = vsel %vm1038, %v1023, 0
          %vm1042 = vcmask 1043456
          %v1043 = vsel %vm1042, %v1019, 0
          %v1045 = vsel %vm1042, %v1034, 0
          %v1047 = vsel %vm1042, %v1020, 0
          %v1049 = vsel %vm1042, %v1035, 0
          %v1051 = vsel %vm1042, %v1021, 0
          %v1053 = vsel %vm1042, %v1036, 0
          %v1055 = vsel %vm1042, %v1022, 0
          %v1057 = vsel %vm1042, %v1037, 0
          %1059 = vmatprep.subr.mxu0 %v1045
          %1060 = vmatpush1.msra.mxu0 %v1043
          %1061 = vmatprep.subr.mxu0 0.0
          %1062 = vmatpush1.msra.mxu0 0.0
          %1063 = vmatprep.subr.mxu0 0.0
          %1064 = vmatpush1.msra.mxu0 0.0
          %1065 = vmatprep.subr.mxu0 0.0
          %1066 = vmatpush1.msra.mxu0 0.0
          %1067 = vmatprep.subr.mxu0 0.0
          %1068 = vmatpush1.msra.mxu0 0.0
          %1069 = vmatprep.subr.mxu0 0.0
          %1070 = vmatpush1.msra.mxu0 0.0
          %1071 = vmatprep.subr.mxu0 0.0
          %1072 = vmatpush1.msra.mxu0 0.0
          %1073 = vmatprep.subr.mxu0 0.0
          %1074 = vmatpush1.msra.mxu0 0.0
          %1075 = vmatprep.subr.mxu0 0.0
          %1076 = vmatpush1.msra.mxu0 0.0
          %1077 = vmatprep.subr.mxu0 0.0
          %1078 = vmatpush1.msra.mxu0 0.0
          %1079 = vmatprep.subr.mxu0 0.0
          %1080 = vmatpush1.msra.mxu0 0.0
          %1081 = vmatprep.subr.mxu0 0.0
          %1082 = vmatpush1.msra.mxu0 0.0
          %1083 = vmatprep.subr.mxu0 0.0
          %1084 = vmatpush1.msra.mxu0 0.0
          %1085 = vmatprep.subr.mxu0 0.0
          %1086 = vmatpush1.msra.mxu0 0.0
          %1087 = vmatprep.subr.mxu0 0.0
          %1088 = vmatpush1.msra.mxu0 0.0
          %1089 = vmatprep.subr.mxu0 0.0
          %1090 = vmatpush1.msra.mxu0 0.0
          %1091 = vmatprep.subr.mxu0 0.0
          %1092 = vmatpush1.msra.mxu0 0.0
          %1093 = vmatprep.subr.mxu0 0.0
          %1094 = vmatpush1.msra.mxu0 0.0
          %1095 = vmatprep.subr.mxu0 0.0
          %1096 = vmatpush1.msra.mxu0 0.0
          %1097 = vmatprep.subr.mxu0 0.0
          %1098 = vmatpush1.msra.mxu0 0.0
          %1099 = vmatprep.subr.mxu0 0.0
          %1100 = vmatpush1.msra.mxu0 0.0
          %1101 = vmatprep.subr.mxu0 0.0
          %1102 = vmatpush1.msra.mxu0 0.0
          %1103 = vmatprep.subr.mxu0 0.0
          %1104 = vmatpush1.msra.mxu0 0.0
          %1105 = vmatprep.subr.mxu0 0.0
          %1106 = vmatpush1.msra.mxu0 0.0
          %1107 = vmatprep.subr.mxu0 0.0
          %1108 = vmatpush1.msra.mxu0 0.0
          %1109 = vmatprep.subr.mxu0 0.0
          %1110 = vmatpush1.msra.mxu0 0.0
          %1111 = vmatprep.subr.mxu0 0.0
          %1112 = vmatpush1.msra.mxu0 0.0
          %1113 = vmatprep.subr.mxu0 0.0
          %1114 = vmatpush1.msra.mxu0 0.0
          %1115 = vmatprep.subr.mxu0 0.0
          %1116 = vmatpush1.msra.mxu0 0.0
          %1117 = vmatprep.subr.mxu0 0.0
          %1118 = vmatpush1.msra.mxu0 0.0
          %1119 = vmatprep.subr.mxu0 0.0
          %1120 = vmatpush1.msra.mxu0 0.0
          %1121 = vmatprep.subr.mxu0 0.0
          %1122 = vmatpush1.msra.mxu0 0.0
          %1123 = vmatprep.mubr.f32.mxu0 0.0
          %1124 = vmatmul.mubr.f32.gmra.mrb[0].mxu0 %v1040
          %v1125 = vpop.f32.mrb[0].mxu0
          %v1126 = vadd.f32 %v1028, %v1125
          %v1127 = vpop.f32.mrb[0].mxu0
          %v1128 = vadd.f32 %v1028, %v1127
          %1129 = vdwg.mxu0
          %1130 = vmatprep.subr.mxu0 %v1049
          %1131 = vmatpush1.msra.mxu0 %v1047
          %1132 = vmatprep.subr.mxu0 0.0
          %1133 = vmatpush1.msra.mxu0 0.0
          %1134 = vmatprep.subr.mxu0 0.0
          %1135 = vmatpush1.msra.mxu0 0.0
          %1136 = vmatprep.subr.mxu0 0.0
          %1137 = vmatpush1.msra.mxu0 0.0
          %1138 = vmatprep.subr.mxu0 0.0
          %1139 = vmatpush1.msra.mxu0 0.0
          %1140 = vmatprep.subr.mxu0 0.0
          %1141 = vmatpush1.msra.mxu0 0.0
          %1142 = vmatprep.subr.mxu0 0.0
          %1143 = vmatpush1.msra.mxu0 0.0
          %1144 = vmatprep.subr.mxu0 0.0
          %1145 = vmatpush1.msra.mxu0 0.0
          %1146 = vmatprep.subr.mxu0 0.0
          %1147 = vmatpush1.msra.mxu0 0.0
          %1148 = vmatprep.subr.mxu0 0.0
          %1149 = vmatpush1.msra.mxu0 0.0
          %1150 = vmatprep.subr.mxu0 0.0
          %1151 = vmatpush1.msra.mxu0 0.0
          %1152 = vmatprep.subr.mxu0 0.0
          %1153 = vmatpush1.msra.mxu0 0.0
          %1154 = vmatprep.subr.mxu0 0.0
          %1155 = vmatpush1.msra.mxu0 0.0
          %1156 = vmatprep.subr.mxu0 0.0
          %1157 = vmatpush1.msra.mxu0 0.0
          %1158 = vmatprep.subr.mxu0 0.0
          %1159 = vmatpush1.msra.mxu0 0.0
          %1160 = vmatprep.subr.mxu0 0.0
          %1161 = vmatpush1.msra.mxu0 0.0
          %1162 = vmatprep.subr.mxu0 0.0
          %1163 = vmatpush1.msra.mxu0 0.0
          %1164 = vmatprep.subr.mxu0 0.0
          %1165 = vmatpush1.msra.mxu0 0.0
          %1166 = vmatprep.subr.mxu0 0.0
          %1167 = vmatpush1.msra.mxu0 0.0
          %1168 = vmatprep.subr.mxu0 0.0
          %1169 = vmatpush1.msra.mxu0 0.0
          %1170 = vmatprep.subr.mxu0 0.0
          %1171 = vmatpush1.msra.mxu0 0.0
          %1172 = vmatprep.subr.mxu0 0.0
          %1173 = vmatpush1.msra.mxu0 0.0
          %1174 = vmatprep.subr.mxu0 0.0
          %1175 = vmatpush1.msra.mxu0 0.0
          %1176 = vmatprep.subr.mxu0 0.0
          %1177 = vmatpush1.msra.mxu0 0.0
          %1178 = vmatprep.subr.mxu0 0.0
          %1179 = vmatpush1.msra.mxu0 0.0
          %1180 = vmatprep.subr.mxu0 0.0
          %1181 = vmatpush1.msra.mxu0 0.0
          %1182 = vmatprep.subr.mxu0 0.0
          %1183 = vmatpush1.msra.mxu0 0.0
          %1184 = vmatprep.subr.mxu0 0.0
          %1185 = vmatpush1.msra.mxu0 0.0
          %1186 = vmatprep.subr.mxu0 0.0
          %1187 = vmatpush1.msra.mxu0 0.0
          %1188 = vmatprep.subr.mxu0 0.0
          %1189 = vmatpush1.msra.mxu0 0.0
          %1190 = vmatprep.subr.mxu0 0.0
          %1191 = vmatpush1.msra.mxu0 0.0
          %1192 = vmatprep.subr.mxu0 0.0
          %1193 = vmatpush1.msra.mxu0 0.0
          %1194 = vmatprep.mubr.f32.mxu0 0.0
          %1195 = vmatmul.mubr.f32.gmra.mrb[0].mxu0 %v1040
          %v1196 = vpop.f32.mrb[0].mxu0
          %v1197 = vadd.f32 %v1028, %v1196
          %v1198 = vpop.f32.mrb[0].mxu0
          %v1199 = vadd.f32 %v1028, %v1198
          %1200 = vdwg.mxu0
          %1201 = vmatprep.subr.mxu0 %v1053
          %1202 = vmatpush1.msra.mxu0 %v1051
          %1203 = vmatprep.subr.mxu0 0.0
          %1204 = vmatpush1.msra.mxu0 0.0
          %1205 = vmatprep.subr.mxu0 0.0
          %1206 = vmatpush1.msra.mxu0 0.0
          %1207 = vmatprep.subr.mxu0 0.0
          %1208 = vmatpush1.msra.mxu0 0.0
          %1209 = vmatprep.subr.mxu0 0.0
          %1210 = vmatpush1.msra.mxu0 0.0
          %1211 = vmatprep.subr.mxu0 0.0
          %1212 = vmatpush1.msra.mxu0 0.0
          %1213 = vmatprep.subr.mxu0 0.0
          %1214 = vmatpush1.msra.mxu0 0.0
          %1215 = vmatprep.subr.mxu0 0.0
          %1216 = vmatpush1.msra.mxu0 0.0
          %1217 = vmatprep.subr.mxu0 0.0
          %1218 = vmatpush1.msra.mxu0 0.0
          %1219 = vmatprep.subr.mxu0 0.0
          %1220 = vmatpush1.msra.mxu0 0.0
          %1221 = vmatprep.subr.mxu0 0.0
          %1222 = vmatpush1.msra.mxu0 0.0
          %1223 = vmatprep.subr.mxu0 0.0
          %1224 = vmatpush1.msra.mxu0 0.0
          %1225 = vmatprep.subr.mxu0 0.0
          %1226 = vmatpush1.msra.mxu0 0.0
          %1227 = vmatprep.subr.mxu0 0.0
          %1228 = vmatpush1.msra.mxu0 0.0
          %1229 = vmatprep.subr.mxu0 0.0
          %1230 = vmatpush1.msra.mxu0 0.0
          %1231 = vmatprep.subr.mxu0 0.0
          %1232 = vmatpush1.msra.mxu0 0.0
          %1233 = vmatprep.subr.mxu0 0.0
          %1234 = vmatpush1.msra.mxu0 0.0
          %1235 = vmatprep.subr.mxu0 0.0
          %1236 = vmatpush1.msra.mxu0 0.0
          %1237 = vmatprep.subr.mxu0 0.0
          %1238 = vmatpush1.msra.mxu0 0.0
          %1239 = vmatprep.subr.mxu0 0.0
          %1240 = vmatpush1.msra.mxu0 0.0
          %1241 = vmatprep.subr.mxu0 0.0
          %1242 = vmatpush1.msra.mxu0 0.0
          %1243 = vmatprep.subr.mxu0 0.0
          %1244 = vmatpush1.msra.mxu0 0.0
          %1245 = vmatprep.subr.mxu0 0.0
          %1246 = vmatpush1.msra.mxu0 0.0
          %1247 = vmatprep.subr.mxu0 0.0
          %1248 = vmatpush1.msra.mxu0 0.0
          %1249 = vmatprep.subr.mxu0 0.0
          %1250 = vmatpush1.msra.mxu0 0.0
          %1251 = vmatprep.subr.mxu0 0.0
          %1252 = vmatpush1.msra.mxu0 0.0
          %1253 = vmatprep.subr.mxu0 0.0
          %1254 = vmatpush1.msra.mxu0 0.0
          %1255 = vmatprep.subr.mxu0 0.0
          %1256 = vmatpush1.msra.mxu0 0.0
          %1257 = vmatprep.subr.mxu0 0.0
          %1258 = vmatpush1.msra.mxu0 0.0
          %1259 = vmatprep.subr.mxu0 0.0
          %1260 = vmatpush1.msra.mxu0 0.0
          %1261 = vmatprep.subr.mxu0 0.0
          %1262 = vmatpush1.msra.mxu0 0.0
          %1263 = vmatprep.subr.mxu0 0.0
          %1264 = vmatpush1.msra.mxu0 0.0
          %1265 = vmatprep.mubr.f32.mxu0 0.0
          %1266 = vmatmul.mubr.f32.gmra.mrb[0].mxu0 %v1040
          %v1267 = vpop.f32.mrb[0].mxu0
          %v1268 = vadd.f32 %v1028, %v1267
          %v1269 = vpop.f32.mrb[0].mxu0
          %v1270 = vadd.f32 %v1028, %v1269
          %1271 = vdwg.mxu0
          %1272 = vmatprep.subr.mxu0 %v1057
          %1273 = vmatpush1.msra.mxu0 %v1055
          %1274 = vmatprep.subr.mxu0 0.0
          %1275 = vmatpush1.msra.mxu0 0.0
          %1276 = vmatprep.subr.mxu0 0.0
          %1277 = vmatpush1.msra.mxu0 0.0
          %1278 = vmatprep.subr.mxu0 0.0
          %1279 = vmatpush1.msra.mxu0 0.0
          %1280 = vmatprep.subr.mxu0 0.0
          %1281 = vmatpush1.msra.mxu0 0.0
          %1282 = vmatprep.subr.mxu0 0.0
          %1283 = vmatpush1.msra.mxu0 0.0
          %1284 = vmatprep.subr.mxu0 0.0
          %1285 = vmatpush1.msra.mxu0 0.0
          %1286 = vmatprep.subr.mxu0 0.0
          %1287 = vmatpush1.msra.mxu0 0.0
          %1288 = vmatprep.subr.mxu0 0.0
          %1289 = vmatpush1.msra.mxu0 0.0
          %1290 = vmatprep.subr.mxu0 0.0
          %1291 = vmatpush1.msra.mxu0 0.0
          %1292 = vmatprep.subr.mxu0 0.0
          %1293 = vmatpush1.msra.mxu0 0.0
          %1294 = vmatprep.subr.mxu0 0.0
          %1295 = vmatpush1.msra.mxu0 0.0
          %1296 = vmatprep.subr.mxu0 0.0
          %1297 = vmatpush1.msra.mxu0 0.0
          %1298 = vmatprep.subr.mxu0 0.0
          %1299 = vmatpush1.msra.mxu0 0.0
          %1300 = vmatprep.subr.mxu0 0.0
          %1301 = vmatpush1.msra.mxu0 0.0
          %1302 = vmatprep.subr.mxu0 0.0
          %1303 = vmatpush1.msra.mxu0 0.0
          %1304 = vmatprep.subr.mxu0 0.0
          %1305 = vmatpush1.msra.mxu0 0.0
          %1306 = vmatprep.subr.mxu0 0.0
          %1307 = vmatpush1.msra.mxu0 0.0
          %1308 = vmatprep.subr.mxu0 0.0
          %1309 = vmatpush1.msra.mxu0 0.0
          %1310 = vmatprep.subr.mxu0 0.0
          %1311 = vmatpush1.msra.mxu0 0.0
          %1312 = vmatprep.subr.mxu0 0.0
          %1313 = vmatpush1.msra.mxu0 0.0
          %1314 = vmatprep.subr.mxu0 0.0
          %1315 = vmatpush1.msra.mxu0 0.0
          %1316 = vmatprep.subr.mxu0 0.0
          %1317 = vmatpush1.msra.mxu0 0.0
          %1318 = vmatprep.subr.mxu0 0.0
          %1319 = vmatpush1.msra.mxu0 0.0
          %1320 = vmatprep.subr.mxu0 0.0
          %1321 = vmatpush1.msra.mxu0 0.0
          %1322 = vmatprep.subr.mxu0 0.0
          %1323 = vmatpush1.msra.mxu0 0.0
          %1324 = vmatprep.subr.mxu0 0.0
          %1325 = vmatpush1.msra.mxu0 0.0
          %1326 = vmatprep.subr.mxu0 0.0
          %1327 = vmatpush1.msra.mxu0 0.0
          %1328 = vmatprep.subr.mxu0 0.0
          %1329 = vmatpush1.msra.mxu0 0.0
          %1330 = vmatprep.subr.mxu0 0.0
          %1331 = vmatpush1.msra.mxu0 0.0
          %1332 = vmatprep.subr.mxu0 0.0
          %1333 = vmatpush1.msra.mxu0 0.0
          %1334 = vmatprep.subr.mxu0 0.0
          %1335 = vmatpush1.msra.mxu0 0.0
          %1336 = vmatprep.mubr.f32.mxu0 0.0
          %1337 = vmatmul.mubr.f32.gmra.mrb[0].mxu0 %v1040
          %v1338 = vpop.f32.mrb[0].mxu0
          %v1339 = vadd.f32 %v1028, %v1338
          %v1340 = vpop.f32.mrb[0].mxu0
          %v1341 = vadd.f32 %v1028, %v1340
          %1342 = vdwg.mxu0
          %v1343 = vmax.f32 %v1126, 0.0
          %v1344 = vmax.f32 %v1128, 0.0
          %v1345 = vmax.f32 %v1197, 0.0
          %v1346 = vmax.f32 %v1199, 0.0
          %v1347 = vmax.f32 %v1268, 0.0
          %v1348 = vmax.f32 %v1270, 0.0
          %v1349 = vmax.f32 %v1339, 0.0
          %v1350 = vmax.f32 %v1341, 0.0
          %v1351 = vld [vmem:[#allocation4] sm:$0xff]
          %1353 = vset.pattern.permute.xlu0 0
          %1354 = vperm.xlu0 %1353, %v1351
          %v1355 = vpop.permute.xlu0 %1354
          %v1357 = vmul.f32 %v1343, %v1355
          %v1358 = vmul.f32 %v1344, %v1355
          %v1359 = vmul.f32 %v1345, %v1355
          %v1360 = vmul.f32 %v1346, %v1355
          %v1361 = vmul.f32 %v1347, %v1355
          %v1362 = vmul.f32 %v1348, %v1355
          %v1363 = vmul.f32 %v1349, %v1355
          %v1364 = vmul.f32 %v1350, %v1355
          %v1365 = vld [vmem:[#allocation5] sm:$0xff]
          %1367 = vset.pattern.permute.xlu0 0
          %1368 = vperm.xlu0 %1367, %v1365
          %v1369 = vpop.permute.xlu0 %1368
          %v1371 = vadd.f32 %v1357, %v1369
          %v1372 = vadd.f32 %v1358, %v1369
          %v1373 = vadd.f32 %v1359, %v1369
          %v1374 = vadd.f32 %v1360, %v1369
          %v1375 = vadd.f32 %v1361, %v1369
          %v1376 = vadd.f32 %v1362, %v1369
          %v1377 = vadd.f32 %v1363, %v1369
          %v1378 = vadd.f32 %v1364, %v1369
          %1379 = vst [vmem:[%s545] sm:$0xff] %v1371
          %1380 = vst [vmem:[%s545 + $0x8] sm:$0xff] %v1372
          %1381 = vst [vmem:[%s545 + $0x10] sm:$0xff] %v1373
          %1382 = vst [vmem:[%s545 + $0x18] sm:$0xff] %v1374
          %1383 = vst [vmem:[%s545 + $0x20] sm:$0xff] %v1375
          %1384 = vst [vmem:[%s545 + $0x28] sm:$0xff] %v1376
          %1385 = vst [vmem:[%s545 + $0x30] sm:$0xff] %v1377
          %1386 = vst [vmem:[%s545 + $0x38] sm:$0xff] %v1378
        $region120: #{fast_smooth_se_norm_conv3d.1} parent=63 // pred_fallthru
          _
        %s1387 = smul.u32 %s34, %s35
        %s1388 = smul.u32 8, %s1387
        %p1389 = scmp.lt.s32.totalorder %s33, 1
        %s1390 = scalar_select %p1389, %s33, 1
        %p1391 = scmp.lt.s32.totalorder %s1388, 31
        %s1392 = scalar_select %p1391, %s1388, 31
        %s1393 = smul.addr %s1390, 32
        %s1394 = sadd.s32 %s1392, %s1393
        %s1395 = smul.addr %s1394, 8
        %s1396 = scalar_lea.vmem %s11, %s1395
        // Predicated region
        $region121: #{fast_smooth_se_norm_conv3d.1} parent=63 // pred_check
          %p1397 = pneg %p305
        $region122: #{fast_smooth_se_norm_conv3d.1} parent=63 // pred_check_branch
          %1399 = sbr.rel (%p1397) target = $region124
        $region123: #{fast_smooth_se_norm_conv3d.1} parent=63 // pred_region
          %s1400 = smul.u32 %s34, %s35
          %s1401 = smul.u32 8, %s1400
        $region124: #{fast_smooth_se_norm_conv3d.1} parent=63 // pred_fallthru
          _
      $region64: #{fast_smooth_se_norm_conv3d.1} parent=5 // pred_fallthru
        _
      %p1402 = scmp.le.s32.totalorder 2, %s23
      // Predicated region
      $region125: #{fast_smooth_se_norm_conv3d.1} parent=5 // pred_check
        %p1403 = pneg %p1402
      $region126: #{fast_smooth_se_norm_conv3d.1} parent=5 // pred_check_branch
        %1405 = sbr.rel (%p1403) target = $region128
      $region127: #{fast_smooth_se_norm_conv3d.1} parent=5 // pred_region
        %s1406 = ssub.s32 %s23, 2
        // Predicated region
        $region129: #{fast_smooth_se_norm_conv3d.1} parent=127 // pred_check
          %p1407 = pneg %p311
        $region130: #{fast_smooth_se_norm_conv3d.1} parent=127 // pred_check_branch
          %1409 = sbr.rel (%p1407) target = $region132
        $region131: #{fast_smooth_se_norm_conv3d.1} parent=127 // pred_region
          %s1410 = smul.u32 %s37, %s38
          %s1411 = smul.u32 8, %s1410
          %p1412 = scmp.lt.s32.totalorder %s36, 1
          %s1413 = scalar_select %p1412, %s36, 1
          %p1414 = scmp.lt.s32.totalorder %s1411, 31
          %s1415 = scalar_select %p1414, %s1411, 31
          %s1416 = smul.addr %s1413, 32
          %s1417 = sadd.s32 %s1415, %s1416
          %s1418 = smul.addr %s1417, 8
          %s1419 = scalar_lea.vmem %s11, %s1418
        $region132: #{fast_smooth_se_norm_conv3d.1} parent=127 // pred_fallthru
          _
      $region128: #{fast_smooth_se_norm_conv3d.1} parent=5 // pred_fallthru
        _
    $region6: #{fast_smooth_se_norm_conv3d.1} parent=1 // loop_footer
      %s27 = sadd.s32 1, %s23
    $region7: #{fast_smooth_se_norm_conv3d.1} parent=1 // loop_footer_branch
      %22 = sbr.rel target = $region3
    $region8: #{fast_smooth_se_norm_conv3d.1} parent=1 // loop_exit
      _
    %1420 = vsyncpa [#allocation7], 1
    %s1421 = scalar_lea.sflag [#allocation7], 1
    %1422 = vsyncpa %s1421, 1
    %1423 = vsyncpa [#allocation9], 1
    %1424 = vsyncpa [#allocation12], 1
    %1425 = vsyncpa [#allocation15], 1
    %1426 = vsyncpa [#allocation18], 1
    %1427 = vsyncpa [#allocation21], 1

</llo_original>
